<compile_context>
chip_gen: v5e
topology: v5e:2x2
jax: 0.10.0
libtpu: 0.0.40
codegen_flags: <defaults>
</compile_context>

<pallas_src>
import functools

import jax
import jax.numpy as jnp
from jax.experimental import pallas as pl
from jax.experimental.pallas import tpu as pltpu

EPS = 1e-5  # torch.nn.InstanceNorm2d default eps


def _convblock_kernel(x_ref, w_ref, o_ref, sum_ref, ssq_ref, *,
                      k, tile_h, w_out, inv_hw):
    """One (sample, phase, row-tile) grid step.

    x_ref:   (1, 1, tile_h + 2p, W + 2p, Cin)  bf16 reflect-padded halo tile
    w_ref:   (k, k, Cin, Cout_pad)             bf16 conv weights
    o_ref:   (1, 1, tile_h, W, Cout_pad)       output tile (f32)
    sum_ref: (1, Cout_pad) f32  per-sample running sum    (VMEM scratch)
    ssq_ref: (1, Cout_pad) f32  per-sample running sum^2  (VMEM scratch)
    """
    phase = pl.program_id(1)
    row = pl.program_id(2)
    last_phase = pl.num_programs(1) - 1

    # New sample -> reset the per-channel statistics accumulators.
    @pl.when(jnp.logical_and(phase == 0, row == 0))
    def _():
        sum_ref[...] = jnp.zeros_like(sum_ref)
        ssq_ref[...] = jnp.zeros_like(ssq_ref)

    # KxK conv as K*K shifted (M, Cin) @ (Cin, Cout_pad) matmuls, f32 accumulation.
    x_tile = x_ref[0, 0]                      # (tile_h+2p, W+2p, Cin), bf16
    cin = x_tile.shape[-1]
    m = tile_h * w_out
    y = None
    for dh in range(k):
        for dw in range(k):
            patch = x_tile[dh:dh + tile_h, dw:dw + w_out, :].reshape(m, cin)
            part = jnp.dot(patch, w_ref[dh, dw],
                           preferred_element_type=jnp.float32)
            y = part if y is None else y + part          # (m, Cout_pad), f32

    # Phase 0: accumulate per-channel sum / sum-of-squares (one-pass variance).
    @pl.when(phase == 0)
    def _():
        sum_ref[...] += jnp.sum(y, axis=0, keepdims=True)
        ssq_ref[...] += jnp.sum(y * y, axis=0, keepdims=True)

    # Last phase: statistics complete -> InstanceNorm + ReLU + lane-dense store.
    @pl.when(phase == last_phase)
    def _():
        mean = sum_ref[...] * inv_hw                        # (1, Cout_pad)
        var = ssq_ref[...] * inv_hw - mean * mean           # E[y^2] - E[y]^2
        inv_std = jax.lax.rsqrt(jnp.maximum(var, 0.0) + EPS)
        y_out = jnp.maximum((y - mean) * inv_std, 0.0)      # ReLU, f32
        o_ref[0, 0] = y_out.reshape(tile_h, w_out, -1).astype(o_ref.dtype)


def _pick_tile_h(h, w, pad, cin, cout_p, budget_bytes=24 * 1024 * 1024):
    """Largest divisor of H whose per-step working set stays under budget."""
    wp = w + 2 * pad
    best = 1
    for th in range(1, h + 1):
        if h % th:
            continue
        m = th * w
        need = (
            2 * (th + 2 * pad) * wp * cin * 2   # double-buffered bf16 input tiles
            + 2 * m * cout_p * 4                # double-buffered f32 output tiles
            + 3 * m * cout_p * 4                # in-kernel f32 accumulator + temps
            + 2 * (th + 2 * pad) * wp * cin * 2 # sliced/reshaped patch copies
        )
        if need <= budget_bytes:
            best = th
    return best


def conv_block_forward_nhwc(x_nhwc, weight, *, kernel_size=3):
    """Fused Conv(reflect pad, stride=1, 'same') + InstanceNorm + ReLU.  NHWC."""
    n, h, w, cin = x_nhwc.shape
    cout = weight.shape[0]
    k = kernel_size
    pad = k // 2
    cout_p = ((cout + 127) // 128) * 128          # lane-dense output stores

    # Reflect pad (matches padding_mode='reflect', padding=k//2).
    xp = jnp.pad(x_nhwc, ((0, 0), (pad, pad), (pad, pad), (0, 0)), mode="reflect")

    tile_h = _pick_tile_h(h, w, pad, cin, cout_p)
    r_tiles = h // tile_h
    num_phases = 1 if r_tiles == 1 else 2

    # Overlapping row windows (halo of 2*pad rows) so every grid block is a plain
    # Blocked tile; bf16 halves activation HBM/VMEM traffic (MXU operand dtype).
    if r_tiles == 1:
        xt = xp[:, None]
    else:
        xt = jnp.stack(
            [xp[:, r * tile_h:r * tile_h + tile_h + 2 * pad]
             for r in range(r_tiles)], axis=1)
    xt = xt.astype(jnp.bfloat16)                  # (N, R, tile_h+2p, W+2p, Cin)

    # (Cout, Cin, K, K) -> (K, K, Cin, Cout_pad), bf16.
    w_mat = jnp.transpose(weight, (2, 3, 1, 0))
    w_mat = jnp.pad(w_mat, ((0, 0), (0, 0), (0, 0), (0, cout_p - cout)))
    w_mat = w_mat.astype(jnp.bfloat16)

    kernel = functools.partial(_convblock_kernel, k=k, tile_h=tile_h, w_out=w,
                               inv_hw=1.0 / float(h * w))

    out = pl.pallas_call(
        kernel,
        out_shape=jax.ShapeDtypeStruct((n, r_tiles, tile_h, w, cout_p),
                                       x_nhwc.dtype),
        grid_spec=pltpu.PrefetchScalarGridSpec(
            num_scalar_prefetch=0,
            grid=(n, num_phases, r_tiles),
            in_specs=[
                pl.BlockSpec((1, 1, tile_h + 2 * pad, w + 2 * pad, cin),
                             lambda ni, pi, ri: (ni, ri, 0, 0, 0)),
                pl.BlockSpec((k, k, cin, cout_p),
                             lambda ni, pi, ri: (0, 0, 0, 0)),
            ],
            out_specs=pl.BlockSpec((1, 1, tile_h, w, cout_p),
                                   lambda ni, pi, ri: (ni, ri, 0, 0, 0)),
            scratch_shapes=[
                pltpu.VMEM((1, cout_p), jnp.float32),   # running sum
                pltpu.VMEM((1, cout_p), jnp.float32),   # running sum of squares
            ],
        ),
        compiler_params=pltpu.CompilerParams(
            dimension_semantics=("parallel", "arbitrary", "arbitrary"),
            vmem_limit_bytes=48 * 1024 * 1024,
        ),
    )(xt, w_mat)

    out = out.reshape(n, h, w, cout_p)[..., :cout]
    return out


@functools.partial(jax.jit, static_argnames=("kernel_size",))
def conv_block_forward(x_nchw, weight, bias=None, *, kernel_size=3):
    """NCHW wrapper matching the PyTorch module layout.

    `bias` is accepted for API parity but unused: InstanceNorm2d(affine=False)
    subtracts the per-(sample, channel) mean right after the conv, so a
    per-channel constant bias cancels exactly.
    """
    del bias
    x_nhwc = jnp.transpose(x_nchw, (0, 2, 3, 1))
    out_nhwc = conv_block_forward_nhwc(x_nhwc, weight, kernel_size=kernel_size)
    return jnp.transpose(out_nhwc, (0, 3, 1, 2))


def _reference(x_nchw, weight, bias, k):
    """Pure-JAX reference (bf16 conv operands, f32 accumulation, like the kernel)."""
    pad = k // 2
    xp = jnp.pad(x_nchw, ((0, 0), (0, 0), (pad, pad), (pad, pad)), mode="reflect")
    y = jax.lax.conv_general_dilated(
        xp.astype(jnp.bfloat16), weight.astype(jnp.bfloat16),
        window_strides=(1, 1), padding="VALID",
        dimension_numbers=("NCHW", "OIHW", "NCHW"),
        preferred_element_type=jnp.float32)
    y = y + bias[None, :, None, None]
    mean = jnp.mean(y, axis=(2, 3), keepdims=True)
    var = jnp.mean((y - mean) ** 2, axis=(2, 3), keepdims=True)
    y = (y - mean) * jax.lax.rsqrt(var + EPS)
    return jnp.maximum(y, 0.0)


if __name__ == "__main__":
    N, CIN, COUT, H, W, K = 2, 4, 8, 16, 16, 3

    key = jax.random.PRNGKey(0)
    kx, kw, kb = jax.random.split(key, 3)

    x = jax.random.normal(kx, (N, CIN, H, W), dtype=jnp.float32)
    weight = 0.1 * jax.random.normal(kw, (COUT, CIN, K, K), dtype=jnp.float32)
    bias = 0.1 * jax.random.normal(kb, (COUT,), dtype=jnp.float32)

    out = conv_block_forward(x, weight, bias, kernel_size=K)
    jax.block_until_ready(out)

    ref = _reference(x, weight, bias, K)

    assert out.shape == (N, COUT, H, W)
    assert bool(jnp.all(out >= 0.0))                 # ReLU output is non-negative
    assert bool(jnp.all(jnp.isfinite(out)))
    max_err = float(jnp.max(jnp.abs(out - ref)))
    assert max_err < 5e-3, f"mismatch vs reference: {max_err}"
    print("KERNEL_OK")
</pallas_src>

<mosaic_0001>
module attributes {stable_mosaic.version = 11 : i64} {
  func.func @_convblock_kernel(%arg0: i32, %arg1: i32, %arg2: i32, %arg3: memref<1x1x18x18x4xbf16, #tpu.memory_space<vmem>>, %arg4: memref<3x3x4x128xbf16, #tpu.memory_space<vmem>>, %arg5: memref<1x1x16x16x128xf32, #tpu.memory_space<vmem>>, %arg6: memref<1x128xf32, #tpu.memory_space<vmem>>, %arg7: memref<1x128xf32, #tpu.memory_space<vmem>>) attributes {dimension_semantics = [#tpu.dimension_semantics<parallel>, #tpu.dimension_semantics<arbitrary>, #tpu.dimension_semantics<arbitrary>], iteration_bounds = array<i64: 2, 1, 1>, scalar_prefetch = 0 : i64, scratch_operands = 2 : i64, tpu.core_type = #tpu.core_type<tc>, window_params = [{transform_indices = @transform_0, window_bounds = array<i64: 1, 1, 18, 18, 4>}, {pipeline_mode = #tpu.pipeline_mode<synchronous>, transform_indices = @transform_1, window_bounds = array<i64: 3, 3, 4, 128>}, {transform_indices = @transform_2, window_bounds = array<i64: 1, 1, 16, 16, 128>}]} {
    %c0_i32 = arith.constant 0 : i32
    %0 = arith.cmpi eq, %arg1, %c0_i32 : i32
    %c0_i32_0 = arith.constant 0 : i32
    %1 = arith.cmpi eq, %arg2, %c0_i32_0 : i32
    %2 = arith.andi %0, %1 : i1
    %3 = arith.extui %2 : i1 to i32
    %c0_i32_1 = arith.constant 0 : i32
    %4 = arith.cmpi ne, %3, %c0_i32_1 : i32
    scf.if %4 {
      %cst_52 = arith.constant 0.000000e+00 : f32
      %66 = vector.broadcast %cst_52 : f32 to vector<1x128xf32>
      %c0_53 = arith.constant 0 : index
      %c0_54 = arith.constant 0 : index
      %67 = vector.load %arg6[%c0_53, %c0_54] : memref<1x128xf32, #tpu.memory_space<vmem>>, vector<1x128xf32>
      tpu.vector_store %arg6[%c0_53, %c0_54], %66 {strides = array<i32>} : memref<1x128xf32, #tpu.memory_space<vmem>>, vector<1x128xf32>,
      %cst_55 = arith.constant 0.000000e+00 : f32
      %68 = vector.broadcast %cst_55 : f32 to vector<1x128xf32>
      %c0_56 = arith.constant 0 : index
      %c0_57 = arith.constant 0 : index
      %69 = vector.load %arg7[%c0_56, %c0_57] : memref<1x128xf32, #tpu.memory_space<vmem>>, vector<1x128xf32>
      tpu.vector_store %arg7[%c0_56, %c0_57], %68 {strides = array<i32>} : memref<1x128xf32, #tpu.memory_space<vmem>>, vector<1x128xf32>,
    } else {
    }
    %c0 = arith.constant 0 : index
    %c0_2 = arith.constant 0 : index
    %c0_3 = arith.constant 0 : index
    %c0_4 = arith.constant 0 : index
    %c0_5 = arith.constant 0 : index
    %5 = vector.load %arg3[%c0, %c0_2, %c0_3, %c0_4, %c0_5] : memref<1x1x18x18x4xbf16, #tpu.memory_space<vmem>>, vector<1x1x18x18x4xbf16>
    %6 = vector.shape_cast %5 : vector<1x1x18x18x4xbf16> to vector<18x18x4xbf16>
    %7 = vector.extract_strided_slice %6 {offsets = [0, 0, 0], sizes = [16, 16, 4], strides = [1, 1, 1]} : vector<18x18x4xbf16> to vector<16x16x4xbf16>
    %8 = vector.shape_cast %7 : vector<16x16x4xbf16> to vector<256x4xbf16>
    %c0_6 = arith.constant 0 : index
    %c0_7 = arith.constant 0 : index
    %c0_8 = arith.constant 0 : index
    %c0_9 = arith.constant 0 : index
    %9 = vector.load %arg4[%c0_6, %c0_7, %c0_8, %c0_9] : memref<3x3x4x128xbf16, #tpu.memory_space<vmem>>, vector<1x1x4x128xbf16>
    %10 = vector.shape_cast %9 : vector<1x1x4x128xbf16> to vector<4x128xbf16>
    %cst = arith.constant dense<0.000000e+00> : vector<256x128xf32>
    %11 = tpu.matmul %8, %10, %cst {dimension_numbers = #tpu.dot_dimension_numbers<[1], [0], [0], [1], [0, 0, 1, 1], [], []>} : vector<256x4xbf16>, vector<4x128xbf16>, vector<256x128xf32> -> vector<256x128xf32>
    %12 = vector.extract_strided_slice %6 {offsets = [0, 1, 0], sizes = [16, 16, 4], strides = [1, 1, 1]} : vector<18x18x4xbf16> to vector<16x16x4xbf16>
    %13 = vector.shape_cast %12 : vector<16x16x4xbf16> to vector<256x4xbf16>
    %c0_10 = arith.constant 0 : index
    %c1 = arith.constant 1 : index
    %c0_11 = arith.constant 0 : index
    %c0_12 = arith.constant 0 : index
    %14 = vector.load %arg4[%c0_10, %c1, %c0_11, %c0_12] : memref<3x3x4x128xbf16, #tpu.memory_space<vmem>>, vector<1x1x4x128xbf16>
    %15 = vector.shape_cast %14 : vector<1x1x4x128xbf16> to vector<4x128xbf16>
    %cst_13 = arith.constant dense<0.000000e+00> : vector<256x128xf32>
    %16 = tpu.matmul %13, %15, %cst_13 {dimension_numbers = #tpu.dot_dimension_numbers<[1], [0], [0], [1], [0, 0, 1, 1], [], []>} : vector<256x4xbf16>, vector<4x128xbf16>, vector<256x128xf32> -> vector<256x128xf32>
    %17 = arith.addf %11, %16 : vector<256x128xf32>
    %18 = vector.extract_strided_slice %6 {offsets = [0, 2, 0], sizes = [16, 16, 4], strides = [1, 1, 1]} : vector<18x18x4xbf16> to vector<16x16x4xbf16>
    %19 = vector.shape_cast %18 : vector<16x16x4xbf16> to vector<256x4xbf16>
    %c0_14 = arith.constant 0 : index
    %c2 = arith.constant 2 : index
    %c0_15 = arith.constant 0 : index
    %c0_16 = arith.constant 0 : index
    %20 = vector.load %arg4[%c0_14, %c2, %c0_15, %c0_16] : memref<3x3x4x128xbf16, #tpu.memory_space<vmem>>, vector<1x1x4x128xbf16>
    %21 = vector.shape_cast %20 : vector<1x1x4x128xbf16> to vector<4x128xbf16>
    %cst_17 = arith.constant dense<0.000000e+00> : vector<256x128xf32>
    %22 = tpu.matmul %19, %21, %cst_17 {dimension_numbers = #tpu.dot_dimension_numbers<[1], [0], [0], [1], [0, 0, 1, 1], [], []>} : vector<256x4xbf16>, vector<4x128xbf16>, vector<256x128xf32> -> vector<256x128xf32>
    %23 = arith.addf %17, %22 : vector<256x128xf32>
    %24 = vector.extract_strided_slice %6 {offsets = [1, 0, 0], sizes = [16, 16, 4], strides = [1, 1, 1]} : vector<18x18x4xbf16> to vector<16x16x4xbf16>
    %25 = vector.shape_cast %24 : vector<16x16x4xbf16> to vector<256x4xbf16>
    %c1_18 = arith.constant 1 : index
    %c0_19 = arith.constant 0 : index
    %c0_20 = arith.constant 0 : index
    %c0_21 = arith.constant 0 : index
    %26 = vector.load %arg4[%c1_18, %c0_19, %c0_20, %c0_21] : memref<3x3x4x128xbf16, #tpu.memory_space<vmem>>, vector<1x1x4x128xbf16>
    %27 = vector.shape_cast %26 : vector<1x1x4x128xbf16> to vector<4x128xbf16>
    %cst_22 = arith.constant dense<0.000000e+00> : vector<256x128xf32>
    %28 = tpu.matmul %25, %27, %cst_22 {dimension_numbers = #tpu.dot_dimension_numbers<[1], [0], [0], [1], [0, 0, 1, 1], [], []>} : vector<256x4xbf16>, vector<4x128xbf16>, vector<256x128xf32> -> vector<256x128xf32>
    %29 = arith.addf %23, %28 : vector<256x128xf32>
    %30 = vector.extract_strided_slice %6 {offsets = [1, 1, 0], sizes = [16, 16, 4], strides = [1, 1, 1]} : vector<18x18x4xbf16> to vector<16x16x4xbf16>
    %31 = vector.shape_cast %30 : vector<16x16x4xbf16> to vector<256x4xbf16>
    %c1_23 = arith.constant 1 : index
    %c1_24 = arith.constant 1 : index
    %c0_25 = arith.constant 0 : index
    %c0_26 = arith.constant 0 : index
    %32 = vector.load %arg4[%c1_23, %c1_24, %c0_25, %c0_26] : memref<3x3x4x128xbf16, #tpu.memory_space<vmem>>, vector<1x1x4x128xbf16>
    %33 = vector.shape_cast %32 : vector<1x1x4x128xbf16> to vector<4x128xbf16>
    %cst_27 = arith.constant dense<0.000000e+00> : vector<256x128xf32>
    %34 = tpu.matmul %31, %33, %cst_27 {dimension_numbers = #tpu.dot_dimension_numbers<[1], [0], [0], [1], [0, 0, 1, 1], [], []>} : vector<256x4xbf16>, vector<4x128xbf16>, vector<256x128xf32> -> vector<256x128xf32>
    %35 = arith.addf %29, %34 : vector<256x128xf32>
    %36 = vector.extract_strided_slice %6 {offsets = [1, 2, 0], sizes = [16, 16, 4], strides = [1, 1, 1]} : vector<18x18x4xbf16> to vector<16x16x4xbf16>
    %37 = vector.shape_cast %36 : vector<16x16x4xbf16> to vector<256x4xbf16>
    %c1_28 = arith.constant 1 : index
    %c2_29 = arith.constant 2 : index
    %c0_30 = arith.constant 0 : index
    %c0_31 = arith.constant 0 : index
    %38 = vector.load %arg4[%c1_28, %c2_29, %c0_30, %c0_31] : memref<3x3x4x128xbf16, #tpu.memory_space<vmem>>, vector<1x1x4x128xbf16>
    %39 = vector.shape_cast %38 : vector<1x1x4x128xbf16> to vector<4x128xbf16>
    %cst_32 = arith.constant dense<0.000000e+00> : vector<256x128xf32>
    %40 = tpu.matmul %37, %39, %cst_32 {dimension_numbers = #tpu.dot_dimension_numbers<[1], [0], [0], [1], [0, 0, 1, 1], [], []>} : vector<256x4xbf16>, vector<4x128xbf16>, vector<256x128xf32> -> vector<256x128xf32>
    %41 = arith.addf %35, %40 : vector<256x128xf32>
    %42 = vector.extract_strided_slice %6 {offsets = [2, 0, 0], sizes = [16, 16, 4], strides = [1, 1, 1]} : vector<18x18x4xbf16> to vector<16x16x4xbf16>
    %43 = vector.shape_cast %42 : vector<16x16x4xbf16> to vector<256x4xbf16>
    %c2_33 = arith.constant 2 : index
    %c0_34 = arith.constant 0 : index
    %c0_35 = arith.constant 0 : index
    %c0_36 = arith.constant 0 : index
    %44 = vector.load %arg4[%c2_33, %c0_34, %c0_35, %c0_36] : memref<3x3x4x128xbf16, #tpu.memory_space<vmem>>, vector<1x1x4x128xbf16>
    %45 = vector.shape_cast %44 : vector<1x1x4x128xbf16> to vector<4x128xbf16>
    %cst_37 = arith.constant dense<0.000000e+00> : vector<256x128xf32>
    %46 = tpu.matmul %43, %45, %cst_37 {dimension_numbers = #tpu.dot_dimension_numbers<[1], [0], [0], [1], [0, 0, 1, 1], [], []>} : vector<256x4xbf16>, vector<4x128xbf16>, vector<256x128xf32> -> vector<256x128xf32>
    %47 = arith.addf %41, %46 : vector<256x128xf32>
    %48 = vector.extract_strided_slice %6 {offsets = [2, 1, 0], sizes = [16, 16, 4], strides = [1, 1, 1]} : vector<18x18x4xbf16> to vector<16x16x4xbf16>
    %49 = vector.shape_cast %48 : vector<16x16x4xbf16> to vector<256x4xbf16>
    %c2_38 = arith.constant 2 : index
    %c1_39 = arith.constant 1 : index
    %c0_40 = arith.constant 0 : index
    %c0_41 = arith.constant 0 : index
    %50 = vector.load %arg4[%c2_38, %c1_39, %c0_40, %c0_41] : memref<3x3x4x128xbf16, #tpu.memory_space<vmem>>, vector<1x1x4x128xbf16>
    %51 = vector.shape_cast %50 : vector<1x1x4x128xbf16> to vector<4x128xbf16>
    %cst_42 = arith.constant dense<0.000000e+00> : vector<256x128xf32>
    %52 = tpu.matmul %49, %51, %cst_42 {dimension_numbers = #tpu.dot_dimension_numbers<[1], [0], [0], [1], [0, 0, 1, 1], [], []>} : vector<256x4xbf16>, vector<4x128xbf16>, vector<256x128xf32> -> vector<256x128xf32>
    %53 = arith.addf %47, %52 : vector<256x128xf32>
    %54 = vector.extract_strided_slice %6 {offsets = [2, 2, 0], sizes = [16, 16, 4], strides = [1, 1, 1]} : vector<18x18x4xbf16> to vector<16x16x4xbf16>
    %55 = vector.shape_cast %54 : vector<16x16x4xbf16> to vector<256x4xbf16>
    %c2_43 = arith.constant 2 : index
    %c2_44 = arith.constant 2 : index
    %c0_45 = arith.constant 0 : index
    %c0_46 = arith.constant 0 : index
    %56 = vector.load %arg4[%c2_43, %c2_44, %c0_45, %c0_46] : memref<3x3x4x128xbf16, #tpu.memory_space<vmem>>, vector<1x1x4x128xbf16>
    %57 = vector.shape_cast %56 : vector<1x1x4x128xbf16> to vector<4x128xbf16>
    %cst_47 = arith.constant dense<0.000000e+00> : vector<256x128xf32>
    %58 = tpu.matmul %55, %57, %cst_47 {dimension_numbers = #tpu.dot_dimension_numbers<[1], [0], [0], [1], [0, 0, 1, 1], [], []>} : vector<256x4xbf16>, vector<4x128xbf16>, vector<256x128xf32> -> vector<256x128xf32>
    %59 = arith.addf %53, %58 : vector<256x128xf32>
    %c0_i32_48 = arith.constant 0 : i32
    %60 = arith.cmpi eq, %arg1, %c0_i32_48 : i32
    %61 = arith.extui %60 : i1 to i32
    %c0_i32_49 = arith.constant 0 : i32
    %62 = arith.cmpi ne, %61, %c0_i32_49 : i32
    scf.if %62 {
      %c0_52 = arith.constant 0 : index
      %c0_53 = arith.constant 0 : index
      %66 = vector.load %arg6[%c0_52, %c0_53] : memref<1x128xf32, #tpu.memory_space<vmem>>, vector<1x128xf32>
      %cst_54 = arith.constant dense<0.000000e+00> : vector<128xf32>
      %67 = vector.multi_reduction <add>, %59, %cst_54 [0] : vector<256x128xf32> to vector<128xf32>
      %68 = vector.shape_cast %67 : vector<128xf32> to vector<1x128xf32>
      %69 = arith.addf %66, %68 : vector<1x128xf32>
      %c0_55 = arith.constant 0 : index
      %c0_56 = arith.constant 0 : index
      %70 = vector.load %arg6[%c0_55, %c0_56] : memref<1x128xf32, #tpu.memory_space<vmem>>, vector<1x128xf32>
      tpu.vector_store %arg6[%c0_55, %c0_56], %69 {strides = array<i32>} : memref<1x128xf32, #tpu.memory_space<vmem>>, vector<1x128xf32>,
      %c0_57 = arith.constant 0 : index
      %c0_58 = arith.constant 0 : index
      %71 = vector.load %arg7[%c0_57, %c0_58] : memref<1x128xf32, #tpu.memory_space<vmem>>, vector<1x128xf32>
      %72 = arith.mulf %59, %59 : vector<256x128xf32>
      %cst_59 = arith.constant dense<0.000000e+00> : vector<128xf32>
      %73 = vector.multi_reduction <add>, %72, %cst_59 [0] : vector<256x128xf32> to vector<128xf32>
      %74 = vector.shape_cast %73 : vector<128xf32> to vector<1x128xf32>
      %75 = arith.addf %71, %74 : vector<1x128xf32>
      %c0_60 = arith.constant 0 : index
      %c0_61 = arith.constant 0 : index
      %76 = vector.load %arg7[%c0_60, %c0_61] : memref<1x128xf32, #tpu.memory_space<vmem>>, vector<1x128xf32>
      tpu.vector_store %arg7[%c0_60, %c0_61], %75 {strides = array<i32>} : memref<1x128xf32, #tpu.memory_space<vmem>>, vector<1x128xf32>,
    } else {
    }
    %c0_i32_50 = arith.constant 0 : i32
    %63 = arith.cmpi eq, %arg1, %c0_i32_50 : i32
    %64 = arith.extui %63 : i1 to i32
    %c0_i32_51 = arith.constant 0 : i32
    %65 = arith.cmpi ne, %64, %c0_i32_51 : i32
    scf.if %65 {
      %c0_52 = arith.constant 0 : index
      %c0_53 = arith.constant 0 : index
      %66 = vector.load %arg6[%c0_52, %c0_53] : memref<1x128xf32, #tpu.memory_space<vmem>>, vector<1x128xf32>
      %cst_54 = arith.constant 3.906250e-03 : f32
      %67 = vector.broadcast %cst_54 : f32 to vector<1x128xf32>
      %68 = arith.mulf %66, %67 : vector<1x128xf32>
      %c0_55 = arith.constant 0 : index
      %c0_56 = arith.constant 0 : index
      %69 = vector.load %arg7[%c0_55, %c0_56] : memref<1x128xf32, #tpu.memory_space<vmem>>, vector<1x128xf32>
      %cst_57 = arith.constant 3.906250e-03 : f32
      %70 = vector.broadcast %cst_57 : f32 to vector<1x128xf32>
      %71 = arith.mulf %69, %70 : vector<1x128xf32>
      %72 = arith.mulf %68, %68 : vector<1x128xf32>
      %73 = arith.subf %71, %72 : vector<1x128xf32>
      %cst_58 = arith.constant 0.000000e+00 : f32
      %74 = vector.broadcast %cst_58 : f32 to vector<1x128xf32>
      %75 = arith.maximumf %73, %74 : vector<1x128xf32>
      %cst_59 = arith.constant 9.99999974E-6 : f32
      %76 = vector.broadcast %cst_59 : f32 to vector<1x128xf32>
      %77 = arith.addf %75, %76 : vector<1x128xf32>
      %78 = math.rsqrt %77 : vector<1x128xf32>
      %79 = vector.broadcast %68 : vector<1x128xf32> to vector<256x128xf32>
      %80 = arith.subf %59, %79 : vector<256x128xf32>
      %81 = vector.broadcast %78 : vector<1x128xf32> to vector<256x128xf32>
      %82 = arith.mulf %80, %81 : vector<256x128xf32>
      %cst_60 = arith.constant 0.000000e+00 : f32
      %83 = vector.broadcast %cst_60 : f32 to vector<256x128xf32>
      %84 = arith.maximumf %82, %83 : vector<256x128xf32>
      %85 = vector.shape_cast %84 : vector<256x128xf32> to vector<16x16x128xf32>
      %c0_61 = arith.constant 0 : index
      %c0_62 = arith.constant 0 : index
      %c0_63 = arith.constant 0 : index
      %c0_64 = arith.constant 0 : index
      %c0_65 = arith.constant 0 : index
      %86 = vector.load %arg5[%c0_61, %c0_62, %c0_63, %c0_64, %c0_65] : memref<1x1x16x16x128xf32, #tpu.memory_space<vmem>>, vector<1x1x16x16x128xf32>
      %87 = vector.shape_cast %86 : vector<1x1x16x16x128xf32> to vector<16x16x128xf32>
      %88 = vector.shape_cast %85 : vector<16x16x128xf32> to vector<1x1x16x16x128xf32>
      tpu.vector_store %arg5[%c0_61, %c0_62, %c0_63, %c0_64, %c0_65], %88 {strides = array<i32>} : memref<1x1x16x16x128xf32, #tpu.memory_space<vmem>>, vector<1x1x16x16x128xf32>,
    } else {
    }
    return
  }
  func.func @transform_0(%arg0: i32, %arg1: i32, %arg2: i32) -> (i32, i32, i32, i32, i32) {
    %c0_i32 = arith.constant 0 : i32
    %c0_i32_0 = arith.constant 0 : i32
    %c0_i32_1 = arith.constant 0 : i32
    %c0_i32_2 = arith.constant 0 : i32
    return %arg0, %arg2, %c0_i32, %c0_i32_0, %c0_i32_1 : i32, i32, i32, i32, i32
  }
  func.func @transform_1(%arg0: i32, %arg1: i32, %arg2: i32) -> (i32, i32, i32, i32) {
    %c0_i32 = arith.constant 0 : i32
    %c0_i32_0 = arith.constant 0 : i32
    %c0_i32_1 = arith.constant 0 : i32
    %c0_i32_2 = arith.constant 0 : i32
    %c0_i32_3 = arith.constant 0 : i32
    return %c0_i32, %c0_i32_0, %c0_i32_1, %c0_i32_2 : i32, i32, i32, i32
  }
  func.func @transform_2(%arg0: i32, %arg1: i32, %arg2: i32) -> (i32, i32, i32, i32, i32) {
    %c0_i32 = arith.constant 0 : i32
    %c0_i32_0 = arith.constant 0 : i32
    %c0_i32_1 = arith.constant 0 : i32
    %c0_i32_2 = arith.constant 0 : i32
    return %arg0, %arg2, %c0_i32, %c0_i32_0, %c0_i32_1 : i32, i32, i32, i32, i32
  }
}

</mosaic_0001>

<llo_original>
// kernel: conv_block_forward.1
$region0: #{conv_block_forward.1}
  #allocation0 [shape = 'u32[]', space=smem, size = 0x4, offset = 0x4, fixed_abs, tag = 'smem constant byte address 0x4 - core index']
  #allocation1 [shape = 'u32[72,128]{1,0:T(1,128)}', space=vmem, size = 0x9000, scoped, tag = 'internal scratch']
  #allocation2 [shape = 'f32[1,128]{1,0:T(1,128)}', space=vmem, size = 0x200, scoped, tag = 'scratch operand']
  #allocation3 [shape = 'f32[1,128]{1,0:T(1,128)}', space=vmem, size = 0x200, scoped, tag = 'scratch operand']
  %s0 = inlined_call_operand.vmem [shape: bf16[2,1,18,18,4], index: 0, kind: input, shape index: {}]
  %s1 = inlined_call_operand.vmem [shape: bf16[3,3,4,128], index: 1, kind: input, shape index: {}]
  %s2 = inlined_call_operand.vmem [shape: f32[2,1,16,16,128], index: 2, kind: output, shape index: {}]
  %s3 = sld [smem:[#allocation0]]
  $region49: #{conv_block_forward.1} parent=0
    _
  %s5 = ssub.s32 1, %s3
  %s6 = scalar_select 0, %s5, %s3
  loop: start=0, step=1, limit=4
  $region2: #{conv_block_forward.1} parent=0 // loop_pre_header
    _
  $region3: #{conv_block_forward.1} parent=0 // loop_header
    %s8 = sphi 0, %s12
    %p9 = scmp.ge.s32.totalorder %s8, 4
    %s15 = sphi 0, %s34
    %s16 = sphi 0, %s30
    %s17 = sphi 0, %s26
    %s18 = sphi 0, %s15
    %s19 = sphi 0, %s16
    %s20 = sphi 0, %s17
    %s21 = sphi 0, %s18
    %s22 = sphi 0, %s19
    %s23 = sphi 0, %s20
    %s39 = sphi 0, %s41
    %s42 = sphi 0, %s39
    %s43 = sphi 0, %s42
    %s59 = sphi 0, %s43
    %s63 = sphi 0, %s63
    %s65 = sphi 0, %s63
    %s66 = sphi 0, %s65
    %s80 = sphi 0, %s66
    %s88 = sphi 0, %s90
    %s91 = sphi 0, %s88
    %s92 = sphi 0, %s91
    %s108 = sphi 0, %s92
  $region4: #{conv_block_forward.1} parent=0 // loop_header_branch
    %11 = sbr.rel (%p9) target = $region8
  $region5: #{conv_block_forward.1} parent=0 // loop_body
    %s13 = ssub.s32 %s8, 1
    %s14 = ssub.s32 %s8, 2
    %s24 = sadd.s32 1, %s17
    %p25 = scmp.ge.s32.totalorder %s24, 1
    %s26 = scalar_select %p25, 0, %s24
    %s27 = sadd.s32 1, %s16
    %s28 = scalar_select %p25, %s27, %s16
    %p29 = scmp.ge.s32.totalorder %s28, 1
    %s30 = scalar_select %p29, 0, %s28
    %s31 = sadd.s32 1, %s15
    %s32 = scalar_select %p29, %s31, %s15
    %p33 = scmp.ge.s32.totalorder %s32, 2
    %s34 = scalar_select %p33, 0, %s32
    %s35 = ssub.s32 %s15, %s34
    %s36 = ssub.s32 %s17, %s26
    %s37 = sor.u32 %s35, %s36
    %p38 = scmp.eq.s32.totalorder %s37, 0
    %s40 = sadd.s32 %s39, 1
    %s41 = scalar_select %p38, %s39, %s40
    %p44 = pneg %p38
    %p45 = scmp.eq.s32.totalorder %s8, 1
    %p46 = por %p44, %p45
    %p47 = scmp.ne.s32.totalorder %s39, %s42
    %p48 = scmp.eq.s32.totalorder %s8, 0
    %p49 = por %p47, %p48
    %p50 = scmp.ne.s32.totalorder %s39, %s42
    %p51 = scmp.eq.s32.totalorder %s13, 1
    %p52 = por %p50, %p51
    %p53 = scmp.ne.s32.totalorder %s42, %s43
    %p54 = scmp.eq.s32.totalorder %s13, 0
    %p55 = por %p53, %p54
    %p56 = scmp.ne.s32.totalorder %s42, %s43
    %p57 = scmp.eq.s32.totalorder %s14, 1
    %p58 = por %p56, %p57
    %p60 = scmp.ne.s32.totalorder %s43, %s59
    %p61 = scmp.eq.s32.totalorder %s14, 0
    %p62 = por %p60, %p61
    %s64 = sadd.s32 %s63, 1
    %p67 = scmp.eq.s32.totalorder %s8, 1
    %p68 = scmp.ne.s32.totalorder %s63, %s65
    %p69 = scmp.eq.s32.totalorder %s8, 0
    %p70 = por %p68, %p69
    %p71 = scmp.ne.s32.totalorder %s63, %s65
    %p72 = scmp.eq.s32.totalorder %s13, 1
    %p73 = por %p71, %p72
    %p74 = scmp.ne.s32.totalorder %s65, %s66
    %p75 = scmp.eq.s32.totalorder %s13, 0
    %p76 = por %p74, %p75
    %p77 = scmp.ne.s32.totalorder %s65, %s66
    %p78 = scmp.eq.s32.totalorder %s14, 1
    %p79 = por %p77, %p78
    %p81 = scmp.ne.s32.totalorder %s66, %s80
    %p82 = scmp.eq.s32.totalorder %s14, 0
    %p83 = por %p81, %p82
    %s84 = ssub.s32 %s15, %s34
    %s85 = ssub.s32 %s17, %s26
    %s86 = sor.u32 %s84, %s85
    %p87 = scmp.eq.s32.totalorder %s86, 0
    %s89 = sadd.s32 %s88, 1
    %s90 = scalar_select %p87, %s88, %s89
    %p93 = pneg %p87
    %p94 = scmp.eq.s32.totalorder %s8, 1
    %p95 = por %p93, %p94
    %p96 = scmp.ne.s32.totalorder %s88, %s91
    %p97 = scmp.eq.s32.totalorder %s8, 0
    %p98 = por %p96, %p97
    %p99 = scmp.ne.s32.totalorder %s88, %s91
    %p100 = scmp.eq.s32.totalorder %s13, 1
    %p101 = por %p99, %p100
    %p102 = scmp.ne.s32.totalorder %s91, %s92
    %p103 = scmp.eq.s32.totalorder %s13, 0
    %p104 = por %p102, %p103
    %p105 = scmp.ne.s32.totalorder %s91, %s92
    %p106 = scmp.eq.s32.totalorder %s14, 1
    %p107 = por %p105, %p106
    %p109 = scmp.ne.s32.totalorder %s92, %s108
    %p110 = scmp.eq.s32.totalorder %s14, 0
    %p111 = por %p109, %p110
    %p112 = scmp.le.s32.totalorder 1, %s8
    %p113 = scmp.lt.s32.totalorder %s8, 3
    %p114 = pnand %p112, %p113
    %p115 = pneg %p114
    // Predicated region
    $region9: #{conv_block_forward.1} parent=5 // pred_check
      _
    $region10: #{conv_block_forward.1} parent=5 // pred_check_branch
      %117 = sbr.rel (%p114) target = $region12
    $region11: #{conv_block_forward.1} parent=5 // pred_region
      %s118 = ssub.s32 %s8, 1
      // Predicated region
      $region13: #{conv_block_forward.1} parent=11 // pred_check
        %p119 = pneg %p76
      $region14: #{conv_block_forward.1} parent=11 // pred_check_branch
        %121 = sbr.rel (%p119) target = $region16
      $region15: #{conv_block_forward.1} parent=11 // pred_region
        _
      $region16: #{conv_block_forward.1} parent=11 // pred_fallthru
        _
    $region12: #{conv_block_forward.1} parent=5 // pred_fallthru
      _
    %p122 = scmp.lt.s32.totalorder %s8, 2
    // Predicated region
    $region17: #{conv_block_forward.1} parent=5 // pred_check
      %p123 = pneg %p122
    $region18: #{conv_block_forward.1} parent=5 // pred_check_branch
      %125 = sbr.rel (%p123) target = $region20
    $region19: #{conv_block_forward.1} parent=5 // pred_region
      // Predicated region
      $region21: #{conv_block_forward.1} parent=19 // pred_check
        %p126 = pneg %p49
      $region22: #{conv_block_forward.1} parent=19 // pred_check_branch
        %128 = sbr.rel (%p126) target = $region24
      $region23: #{conv_block_forward.1} parent=19 // pred_region
        %p129 = scmp.lt.s32.totalorder %s15, 1
        %s130 = scalar_select %p129, %s15, 1
        %p131 = scmp.lt.s32.totalorder %s17, 0
        %s132 = scalar_select %p131, %s17, 0
        %s133 = smul.addr %s132, 54
        %s134 = smul.addr %s130, 54
        %s135 = sadd.s32 %s133, %s134
        %s136 = smul.addr %s135, 4
        %s137 = scalar_lea.vmem %s0, %s136
      $region24: #{conv_block_forward.1} parent=19 // pred_fallthru
        _
    $region20: #{conv_block_forward.1} parent=5 // pred_fallthru
      _
    %p138 = scmp.le.s32.totalorder 1, %s8
    %p139 = scmp.lt.s32.totalorder %s8, 3
    %p140 = pnand %p138, %p139
    %p141 = pneg %p140
    // Predicated region
    $region25: #{conv_block_forward.1} parent=5 // pred_check
      _
    $region26: #{conv_block_forward.1} parent=5 // pred_check_branch
      %143 = sbr.rel (%p140) target = $region28
    $region27: #{conv_block_forward.1} parent=5 // pred_region
      %s144 = ssub.s32 %s8, 1
      %p145 = scmp.lt.s32.totalorder %s18, 1
      %s146 = scalar_select %p145, %s18, 1
      %p147 = scmp.lt.s32.totalorder %s20, 0
      %s148 = scalar_select %p147, %s20, 0
      %s149 = smul.addr %s148, 54
      %s150 = smul.addr %s146, 54
      %s151 = sadd.s32 %s149, %s150
      %s152 = smul.addr %s151, 4
      %s153 = scalar_lea.vmem %s0, %s152
      %p154 = pneg %p55
      %p155 = pneg %p52
      %p156 = pneg %p76
      %p157 = pneg %p73
      %p158 = pneg %p104
      %p159 = pneg %p101
      %p160 = scmp.lt.s32.totalorder %s18, 1
      %s161 = scalar_select %p160, %s18, 1
      %p162 = scmp.lt.s32.totalorder %s20, 0
      %s163 = scalar_select %p162, %s20, 0
      %s164 = smul.addr %s163, 32
      %s165 = smul.addr %s161, 32
      %s166 = sadd.s32 %s164, %s165
      %s167 = smul.addr %s166, 8
      %s168 = scalar_lea.vmem %s2, %s167
      %p169 = scmp.lt.s32.totalorder %s18, 1
      %s170 = scalar_select %p169, %s18, 1
      %p171 = scmp.lt.s32.totalorder %s20, 0
      %s172 = scalar_select %p171, %s20, 0
      %s173 = smul.addr %s172, 54
      %s174 = smul.addr %s170, 54
      %s175 = sadd.s32 %s173, %s174
      %s176 = smul.addr %s175, 4
      %s177 = scalar_lea.vmem %s0, %s176
      %p178 = scmp.lt.s32.totalorder %s18, 1
      %s179 = scalar_select %p178, %s18, 1
      %p180 = scmp.lt.s32.totalorder %s20, 0
      %s181 = scalar_select %p180, %s20, 0
      %s182 = smul.addr %s181, 32
      %s183 = smul.addr %s179, 32
      %s184 = sadd.s32 %s182, %s183
      %s185 = smul.addr %s184, 8
      %s186 = scalar_lea.vmem %s2, %s185
      %p188 = scmp.eq.s32.totalorder %s19, 0
      %p189 = scmp.eq.s32.totalorder %s20, 0
      %p190 = pnand %p188, %p189
      %p191 = pneg %p190
      // Predicated region
      $region29: #{conv_block_forward.1} parent=27 // pred_check
        _
      $region30: #{conv_block_forward.1} parent=27 // pred_check_branch
        %193 = sbr.rel (%p190) target = $region32
      $region31: #{conv_block_forward.1} parent=27 // pred_region
        %194 = vst [vmem:[#allocation2] sm:$0x1] 0.0
        %195 = vst [vmem:[#allocation3] sm:$0x1] 0.0
      $region32: #{conv_block_forward.1} parent=27 // pred_fallthru
        _
      %v196 = vld [vmem:[%s177] sm:$0xf]
      %v197 = vld [vmem:[%s177 + $0x4] sm:$0xf]
      %v198 = vld [vmem:[%s177 + $0x8] sm:$0x1]
      %v199 = vld [vmem:[%s177 + $0xc] sm:$0xf]
      %v200 = vld [vmem:[%s177 + $0x10] sm:$0xf]
      %v201 = vld [vmem:[%s177 + $0x14] sm:$0x1]
      %v202 = vld [vmem:[%s177 + $0x18] sm:$0xf]
      %v203 = vld [vmem:[%s177 + $0x1c] sm:$0xf]
      %v204 = vld [vmem:[%s177 + $0x20] sm:$0x1]
      %v205 = vld [vmem:[%s177 + $0x24] sm:$0xf]
      %v206 = vld [vmem:[%s177 + $0x28] sm:$0xf]
      %v207 = vld [vmem:[%s177 + $0x2c] sm:$0x1]
      %v208 = vld [vmem:[%s177 + $0x30] sm:$0xf]
      %v209 = vld [vmem:[%s177 + $0x34] sm:$0xf]
      %v210 = vld [vmem:[%s177 + $0x38] sm:$0x1]
      %v211 = vld [vmem:[%s177 + $0x3c] sm:$0xf]
      %v212 = vld [vmem:[%s177 + $0x40] sm:$0xf]
      %v213 = vld [vmem:[%s177 + $0x44] sm:$0x1]
      %v214 = vld [vmem:[%s177 + $0x48] sm:$0xf]
      %v215 = vld [vmem:[%s177 + $0x4c] sm:$0xf]
      %v216 = vld [vmem:[%s177 + $0x50] sm:$0x1]
      %v217 = vld [vmem:[%s177 + $0x54] sm:$0xf]
      %v218 = vld [vmem:[%s177 + $0x58] sm:$0xf]
      %v219 = vld [vmem:[%s177 + $0x5c] sm:$0x1]
      %v220 = vld [vmem:[%s177 + $0x60] sm:$0xf]
      %v221 = vld [vmem:[%s177 + $0x64] sm:$0xf]
      %v222 = vld [vmem:[%s177 + $0x68] sm:$0x1]
      %v223 = vld [vmem:[%s177 + $0x6c] sm:$0xf]
      %v224 = vld [vmem:[%s177 + $0x70] sm:$0xf]
      %v225 = vld [vmem:[%s177 + $0x74] sm:$0x1]
      %v226 = vld [vmem:[%s177 + $0x78] sm:$0xf]
      %v227 = vld [vmem:[%s177 + $0x7c] sm:$0xf]
      %v228 = vld [vmem:[%s177 + $0x80] sm:$0x1]
      %v229 = vld [vmem:[%s177 + $0x84] sm:$0xf]
      %v230 = vld [vmem:[%s177 + $0x88] sm:$0xf]
      %v231 = vld [vmem:[%s177 + $0x8c] sm:$0x1]
      %v232 = vld [vmem:[%s177 + $0x90] sm:$0xf]
      %v233 = vld [vmem:[%s177 + $0x94] sm:$0xf]
      %v234 = vld [vmem:[%s177 + $0x98] sm:$0x1]
      %v235 = vld [vmem:[%s177 + $0x9c] sm:$0xf]
      %v236 = vld [vmem:[%s177 + $0xa0] sm:$0xf]
      %v237 = vld [vmem:[%s177 + $0xa4] sm:$0x1]
      %v238 = vld [vmem:[%s177 + $0xa8] sm:$0xf]
      %v239 = vld [vmem:[%s177 + $0xac] sm:$0xf]
      %v240 = vld [vmem:[%s177 + $0xb0] sm:$0x1]
      %v241 = vld [vmem:[%s177 + $0xb4] sm:$0xf]
      %v242 = vld [vmem:[%s177 + $0xb8] sm:$0xf]
      %v243 = vld [vmem:[%s177 + $0xbc] sm:$0x1]
      %v244 = vld [vmem:[%s177 + $0xc0] sm:$0xf]
      %v245 = vld [vmem:[%s177 + $0xc4] sm:$0xf]
      %v246 = vld [vmem:[%s177 + $0xc8] sm:$0x1]
      %v247 = vld [vmem:[%s177 + $0xcc] sm:$0xf]
      %v248 = vld [vmem:[%s177 + $0xd0] sm:$0xf]
      %v249 = vld [vmem:[%s177 + $0xd4] sm:$0x1]
      %v250 = vld [vmem:[%s1] sm:$0x3]
      %vm251 = vsmask.f32 3328
      %vm252 = vsmask.f32 7440
      %vm253 = vmor %vm251, %vm252
      %v255 = vshrl.u32 %v196, 16
      %v257 = vrot.slane %v255, 4
      %v258 = vshll.u32 %v196, 16
      %v260 = vrot.slane %v258, 5
      %v261 = vor.u32 %v257, %v260
      %v262 = vrot.slane %v261, 4
      %v264 = vshll.u32 %v197, 16
      %v266 = vrot.slane %v264, 5
      %v267 = vsel %vm253, %v262, %v266
      %v268 = vshrl.u32 %v197, 16
      %v270 = vrot.slane %v268, 4
      %v271 = vor.u32 %v270, %v266
      %v272 = vrot.slane %v271, 4
      %v274 = vshll.u32 %v198, 16
      %v276 = vrot.slane %v274, 5
      %v277 = vsel %vm253, %v272, %v276
      %v279 = vshrl.u32 %v199, 16
      %v281 = vrot.slane %v279, 4
      %v282 = vshll.u32 %v199, 16
      %v284 = vrot.slane %v282, 5
      %v285 = vor.u32 %v281, %v284
      %v286 = vrot.slane %v285, 4
      %v288 = vshll.u32 %v200, 16
      %v290 = vrot.slane %v288, 5
      %v291 = vsel %vm253, %v286, %v290
      %v292 = vshrl.u32 %v200, 16
      %v294 = vrot.slane %v292, 4
      %v295 = vor.u32 %v294, %v290
      %v296 = vrot.slane %v295, 4
      %v298 = vshll.u32 %v201, 16
      %v300 = vrot.slane %v298, 5
      %v301 = vsel %vm253, %v296, %v300
      %v303 = vshrl.u32 %v202, 16
      %v305 = vrot.slane %v303, 4
      %v306 = vshll.u32 %v202, 16
      %v308 = vrot.slane %v306, 5
      %v309 = vor.u32 %v305, %v308
      %v310 = vrot.slane %v309, 4
      %v312 = vshll.u32 %v203, 16
      %v314 = vrot.slane %v312, 5
      %v315 = vsel %vm253, %v310, %v314
      %v316 = vshrl.u32 %v203, 16
      %v318 = vrot.slane %v316, 4
      %v319 = vor.u32 %v318, %v314
      %v320 = vrot.slane %v319, 4
      %v322 = vshll.u32 %v204, 16
      %v324 = vrot.slane %v322, 5
      %v325 = vsel %vm253, %v320, %v324
      %v327 = vshrl.u32 %v205, 16
      %v329 = vrot.slane %v327, 4
      %v330 = vshll.u32 %v205, 16
      %v332 = vrot.slane %v330, 5
      %v333 = vor.u32 %v329, %v332
      %v334 = vrot.slane %v333, 4
      %v336 = vshll.u32 %v206, 16
      %v338 = vrot.slane %v336, 5
      %v339 = vsel %vm253, %v334, %v338
      %v340 = vshrl.u32 %v206, 16
      %v342 = vrot.slane %v340, 4
      %v343 = vor.u32 %v342, %v338
      %v344 = vrot.slane %v343, 4
      %v346 = vshll.u32 %v207, 16
      %v348 = vrot.slane %v346, 5
      %v349 = vsel %vm253, %v344, %v348
      %v351 = vshrl.u32 %v208, 16
      %v353 = vrot.slane %v351, 4
      %v354 = vshll.u32 %v208, 16
      %v356 = vrot.slane %v354, 5
      %v357 = vor.u32 %v353, %v356
      %v358 = vrot.slane %v357, 4
      %v360 = vshll.u32 %v209, 16
      %v362 = vrot.slane %v360, 5
      %v363 = vsel %vm253, %v358, %v362
      %v364 = vshrl.u32 %v209, 16
      %v366 = vrot.slane %v364, 4
      %v367 = vor.u32 %v366, %v362
      %v368 = vrot.slane %v367, 4
      %v370 = vshll.u32 %v210, 16
      %v372 = vrot.slane %v370, 5
      %v373 = vsel %vm253, %v368, %v372
      %v375 = vshrl.u32 %v211, 16
      %v377 = vrot.slane %v375, 4
      %v378 = vshll.u32 %v211, 16
      %v380 = vrot.slane %v378, 5
      %v381 = vor.u32 %v377, %v380
      %v382 = vrot.slane %v381, 4
      %v384 = vshll.u32 %v212, 16
      %v386 = vrot.slane %v384, 5
      %v387 = vsel %vm253, %v382, %v386
      %v388 = vshrl.u32 %v212, 16
      %v390 = vrot.slane %v388, 4
      %v391 = vor.u32 %v390, %v386
      %v392 = vrot.slane %v391, 4
      %v394 = vshll.u32 %v213, 16
      %v396 = vrot.slane %v394, 5
      %v397 = vsel %vm253, %v392, %v396
      %v399 = vshrl.u32 %v214, 16
      %v401 = vrot.slane %v399, 4
      %v402 = vshll.u32 %v214, 16
      %v404 = vrot.slane %v402, 5
      %v405 = vor.u32 %v401, %v404
      %v406 = vrot.slane %v405, 4
      %v408 = vshll.u32 %v215, 16
      %v410 = vrot.slane %v408, 5
      %v411 = vsel %vm253, %v406, %v410
      %v412 = vshrl.u32 %v215, 16
      %v414 = vrot.slane %v412, 4
      %v415 = vor.u32 %v414, %v410
      %v416 = vrot.slane %v415, 4
      %v418 = vshll.u32 %v216, 16
      %v420 = vrot.slane %v418, 5
      %v421 = vsel %vm253, %v416, %v420
      %v423 = vshrl.u32 %v217, 16
      %v425 = vrot.slane %v423, 4
      %v426 = vshll.u32 %v217, 16
      %v428 = vrot.slane %v426, 5
      %v429 = vor.u32 %v425, %v428
      %v430 = vrot.slane %v429, 4
      %v432 = vshll.u32 %v218, 16
      %v434 = vrot.slane %v432, 5
      %v435 = vsel %vm253, %v430, %v434
      %v436 = vshrl.u32 %v218, 16
      %v438 = vrot.slane %v436, 4
      %v439 = vor.u32 %v438, %v434
      %v440 = vrot.slane %v439, 4
      %v442 = vshll.u32 %v219, 16
      %v444 = vrot.slane %v442, 5
      %v445 = vsel %vm253, %v440, %v444
      %v447 = vshrl.u32 %v220, 16
      %v449 = vrot.slane %v447, 4
      %v450 = vshll.u32 %v220, 16
      %v452 = vrot.slane %v450, 5
      %v453 = vor.u32 %v449, %v452
      %v454 = vrot.slane %v453, 4
      %v456 = vshll.u32 %v221, 16
      %v458 = vrot.slane %v456, 5
      %v459 = vsel %vm253, %v454, %v458
      %v460 = vshrl.u32 %v221, 16
      %v462 = vrot.slane %v460, 4
      %v463 = vor.u32 %v462, %v458
      %v464 = vrot.slane %v463, 4
      %v466 = vshll.u32 %v222, 16
      %v468 = vrot.slane %v466, 5
      %v469 = vsel %vm253, %v464, %v468
      %v471 = vshrl.u32 %v223, 16
      %v473 = vrot.slane %v471, 4
      %v474 = vshll.u32 %v223, 16
      %v476 = vrot.slane %v474, 5
      %v477 = vor.u32 %v473, %v476
      %v478 = vrot.slane %v477, 4
      %v480 = vshll.u32 %v224, 16
      %v482 = vrot.slane %v480, 5
      %v483 = vsel %vm253, %v478, %v482
      %v484 = vshrl.u32 %v224, 16
      %v486 = vrot.slane %v484, 4
      %v487 = vor.u32 %v486, %v482
      %v488 = vrot.slane %v487, 4
      %v490 = vshll.u32 %v225, 16
      %v492 = vrot.slane %v490, 5
      %v493 = vsel %vm253, %v488, %v492
      %v495 = vshrl.u32 %v226, 16
      %v497 = vrot.slane %v495, 4
      %v498 = vshll.u32 %v226, 16
      %v500 = vrot.slane %v498, 5
      %v501 = vor.u32 %v497, %v500
      %v502 = vrot.slane %v501, 4
      %v504 = vshll.u32 %v227, 16
      %v506 = vrot.slane %v504, 5
      %v507 = vsel %vm253, %v502, %v506
      %v508 = vshrl.u32 %v227, 16
      %v510 = vrot.slane %v508, 4
      %v511 = vor.u32 %v510, %v506
      %v512 = vrot.slane %v511, 4
      %v514 = vshll.u32 %v228, 16
      %v516 = vrot.slane %v514, 5
      %v517 = vsel %vm253, %v512, %v516
      %v519 = vshrl.u32 %v229, 16
      %v521 = vrot.slane %v519, 4
      %v522 = vshll.u32 %v229, 16
      %v524 = vrot.slane %v522, 5
      %v525 = vor.u32 %v521, %v524
      %v526 = vrot.slane %v525, 4
      %v528 = vshll.u32 %v230, 16
      %v530 = vrot.slane %v528, 5
      %v531 = vsel %vm253, %v526, %v530
      %v532 = vshrl.u32 %v230, 16
      %v534 = vrot.slane %v532, 4
      %v535 = vor.u32 %v534, %v530
      %v536 = vrot.slane %v535, 4
      %v538 = vshll.u32 %v231, 16
      %v540 = vrot.slane %v538, 5
      %v541 = vsel %vm253, %v536, %v540
      %v543 = vshrl.u32 %v232, 16
      %v545 = vrot.slane %v543, 4
      %v546 = vshll.u32 %v232, 16
      %v548 = vrot.slane %v546, 5
      %v549 = vor.u32 %v545, %v548
      %v550 = vrot.slane %v549, 4
      %v552 = vshll.u32 %v233, 16
      %v554 = vrot.slane %v552, 5
      %v555 = vsel %vm253, %v550, %v554
      %v556 = vshrl.u32 %v233, 16
      %v558 = vrot.slane %v556, 4
      %v559 = vor.u32 %v558, %v554
      %v560 = vrot.slane %v559, 4
      %v562 = vshll.u32 %v234, 16
      %v564 = vrot.slane %v562, 5
      %v565 = vsel %vm253, %v560, %v564
      %v567 = vshrl.u32 %v235, 16
      %v569 = vrot.slane %v567, 4
      %v570 = vshll.u32 %v235, 16
      %v572 = vrot.slane %v570, 5
      %v573 = vor.u32 %v569, %v572
      %v574 = vrot.slane %v573, 4
      %v576 = vshll.u32 %v236, 16
      %v578 = vrot.slane %v576, 5
      %v579 = vsel %vm253, %v574, %v578
      %v580 = vshrl.u32 %v236, 16
      %v582 = vrot.slane %v580, 4
      %v583 = vor.u32 %v582, %v578
      %v584 = vrot.slane %v583, 4
      %v586 = vshll.u32 %v237, 16
      %v588 = vrot.slane %v586, 5
      %v589 = vsel %vm253, %v584, %v588
      %v591 = vshrl.u32 %v238, 16
      %v593 = vrot.slane %v591, 4
      %v594 = vshll.u32 %v238, 16
      %v596 = vrot.slane %v594, 5
      %v597 = vor.u32 %v593, %v596
      %v598 = vrot.slane %v597, 4
      %v600 = vshll.u32 %v239, 16
      %v602 = vrot.slane %v600, 5
      %v603 = vsel %vm253, %v598, %v602
      %v604 = vshrl.u32 %v239, 16
      %v606 = vrot.slane %v604, 4
      %v607 = vor.u32 %v606, %v602
      %v608 = vrot.slane %v607, 4
      %v610 = vshll.u32 %v240, 16
      %v612 = vrot.slane %v610, 5
      %v613 = vsel %vm253, %v608, %v612
      %v615 = vshrl.u32 %v241, 16
      %v617 = vrot.slane %v615, 4
      %v618 = vshll.u32 %v241, 16
      %v620 = vrot.slane %v618, 5
      %v621 = vor.u32 %v617, %v620
      %v622 = vrot.slane %v621, 4
      %v624 = vshll.u32 %v242, 16
      %v626 = vrot.slane %v624, 5
      %v627 = vsel %vm253, %v622, %v626
      %v628 = vshrl.u32 %v242, 16
      %v630 = vrot.slane %v628, 4
      %v631 = vor.u32 %v630, %v626
      %v632 = vrot.slane %v631, 4
      %v634 = vshll.u32 %v243, 16
      %v636 = vrot.slane %v634, 5
      %v637 = vsel %vm253, %v632, %v636
      %s638 = scalar_lea.vmem %s1, 2
      %v639 = vld [vmem:[%s638] sm:$0x3]
      %v640 = vunpack.c.l.b16 %v267
      %v641 = vunpack.c.l.b16 %v277
      %v642 = vunpack.c.l.b16 %v291
      %v643 = vunpack.c.l.b16 %v301
      %v644 = vunpack.c.l.b16 %v315
      %v645 = vunpack.c.l.b16 %v325
      %v646 = vunpack.c.l.b16 %v339
      %v647 = vunpack.c.l.b16 %v349
      %v648 = vunpack.c.l.b16 %v363
      %v649 = vunpack.c.l.b16 %v373
      %v650 = vunpack.c.l.b16 %v387
      %v651 = vunpack.c.l.b16 %v397
      %v652 = vunpack.c.l.b16 %v411
      %v653 = vunpack.c.l.b16 %v421
      %v654 = vunpack.c.l.b16 %v435
      %v655 = vunpack.c.l.b16 %v445
      %v656 = vunpack.c.l.b16 %v459
      %v657 = vunpack.c.l.b16 %v469
      %v658 = vunpack.c.l.b16 %v483
      %v659 = vunpack.c.l.b16 %v493
      %v660 = vunpack.c.l.b16 %v507
      %v661 = vunpack.c.l.b16 %v517
      %v662 = vunpack.c.l.b16 %v531
      %v663 = vunpack.c.l.b16 %v541
      %v664 = vunpack.c.l.b16 %v555
      %v665 = vunpack.c.l.b16 %v565
      %v666 = vunpack.c.l.b16 %v579
      %v667 = vunpack.c.l.b16 %v589
      %v668 = vunpack.c.l.b16 %v603
      %v669 = vunpack.c.l.b16 %v613
      %v670 = vunpack.c.l.b16 %v627
      %v671 = vunpack.c.l.b16 %v637
      %v672 = vpack.c.b16 %v641, %v640
      %v673 = vpack.c.b16 %v643, %v642
      %v674 = vpack.c.b16 %v645, %v644
      %v675 = vpack.c.b16 %v647, %v646
      %v676 = vpack.c.b16 %v649, %v648
      %v677 = vpack.c.b16 %v651, %v650
      %v678 = vpack.c.b16 %v653, %v652
      %v679 = vpack.c.b16 %v655, %v654
      %v680 = vpack.c.b16 %v657, %v656
      %v681 = vpack.c.b16 %v659, %v658
      %v682 = vpack.c.b16 %v661, %v660
      %v683 = vpack.c.b16 %v663, %v662
      %v684 = vpack.c.b16 %v665, %v664
      %v685 = vpack.c.b16 %v667, %v666
      %v686 = vpack.c.b16 %v669, %v668
      %v687 = vpack.c.b16 %v671, %v670
      %vm688 = vcmask 31744
      %v690 = vsel %vm688, %v672, 0
      %v693 = vsel %vm688, %v673, 0
      %v696 = vsel %vm688, %v674, 0
      %v699 = vsel %vm688, %v675, 0
      %v702 = vsel %vm688, %v676, 0
      %v705 = vsel %vm688, %v677, 0
      %v708 = vsel %vm688, %v678, 0
      %v711 = vsel %vm688, %v679, 0
      %v714 = vsel %vm688, %v680, 0
      %v717 = vsel %vm688, %v681, 0
      %v720 = vsel %vm688, %v682, 0
      %v723 = vsel %vm688, %v683, 0
      %v726 = vsel %vm688, %v684, 0
      %v729 = vsel %vm688, %v685, 0
      %v732 = vsel %vm688, %v686, 0
      %v735 = vsel %vm688, %v687, 0
      %vm737 = vcmask 1041408
      %v739 = vsel %vm737, %v639, 0
      %741 = vmatpush.bf16.msra.mxu0 0
      %742 = vmatpush.bf16.msra.mxu0 0
      %743 = vmatpush.bf16.msra.mxu0 0
      %744 = vmatpush.bf16.msra.mxu0 0
      %745 = vmatpush.bf16.msra.mxu0 0
      %746 = vmatpush.bf16.msra.mxu0 0
      %747 = vmatpush.bf16.msra.mxu0 0
      %748 = vmatpush.bf16.msra.mxu0 %v739
      %749 = vmatmul.bf16.gmra.mxu0 %v690
      %v750 = vpop.f32.mrf.mxu0
      %v751 = vadd.f32 0.0, %v750
      %v752 = vpop.f32.mrf.mxu0
      %v753 = vadd.f32 0.0, %v752
      %754 = vmatmul.bf16.gmra.mxu0 %v693
      %v755 = vpop.f32.mrf.mxu0
      %v756 = vadd.f32 0.0, %v755
      %v757 = vpop.f32.mrf.mxu0
      %v758 = vadd.f32 0.0, %v757
      %759 = vmatmul.bf16.gmra.mxu0 %v696
      %v760 = vpop.f32.mrf.mxu0
      %v761 = vadd.f32 0.0, %v760
      %v762 = vpop.f32.mrf.mxu0
      %v763 = vadd.f32 0.0, %v762
      %764 = vmatmul.bf16.gmra.mxu0 %v699
      %v765 = vpop.f32.mrf.mxu0
      %v766 = vadd.f32 0.0, %v765
      %v767 = vpop.f32.mrf.mxu0
      %v768 = vadd.f32 0.0, %v767
      %769 = vmatmul.bf16.gmra.mxu0 %v702
      %v770 = vpop.f32.mrf.mxu0
      %v771 = vadd.f32 0.0, %v770
      %v772 = vpop.f32.mrf.mxu0
      %v773 = vadd.f32 0.0, %v772
      %774 = vmatmul.bf16.gmra.mxu0 %v705
      %v775 = vpop.f32.mrf.mxu0
      %v776 = vadd.f32 0.0, %v775
      %v777 = vpop.f32.mrf.mxu0
      %v778 = vadd.f32 0.0, %v777
      %779 = vmatmul.bf16.gmra.mxu0 %v708
      %v780 = vpop.f32.mrf.mxu0
      %v781 = vadd.f32 0.0, %v780
      %v782 = vpop.f32.mrf.mxu0
      %v783 = vadd.f32 0.0, %v782
      %784 = vmatmul.bf16.gmra.mxu0 %v711
      %v785 = vpop.f32.mrf.mxu0
      %v786 = vadd.f32 0.0, %v785
      %v787 = vpop.f32.mrf.mxu0
      %v788 = vadd.f32 0.0, %v787
      %789 = vmatmul.bf16.gmra.mxu0 %v714
      %v790 = vpop.f32.mrf.mxu0
      %v791 = vadd.f32 0.0, %v790
      %v792 = vpop.f32.mrf.mxu0
      %v793 = vadd.f32 0.0, %v792
      %794 = vmatmul.bf16.gmra.mxu0 %v717
      %v795 = vpop.f32.mrf.mxu0
      %v796 = vadd.f32 0.0, %v795
      %v797 = vpop.f32.mrf.mxu0
      %v798 = vadd.f32 0.0, %v797
      %799 = vmatmul.bf16.gmra.mxu0 %v720
      %v800 = vpop.f32.mrf.mxu0
      %v801 = vadd.f32 0.0, %v800
      %v802 = vpop.f32.mrf.mxu0
      %v803 = vadd.f32 0.0, %v802
      %804 = vmatmul.bf16.gmra.mxu0 %v723
      %v805 = vpop.f32.mrf.mxu0
      %v806 = vadd.f32 0.0, %v805
      %v807 = vpop.f32.mrf.mxu0
      %v808 = vadd.f32 0.0, %v807
      %809 = vmatmul.bf16.gmra.mxu0 %v726
      %v810 = vpop.f32.mrf.mxu0
      %v811 = vadd.f32 0.0, %v810
      %v812 = vpop.f32.mrf.mxu0
      %v813 = vadd.f32 0.0, %v812
      %814 = vmatmul.bf16.gmra.mxu0 %v729
      %v815 = vpop.f32.mrf.mxu0
      %v816 = vadd.f32 0.0, %v815
      %v817 = vpop.f32.mrf.mxu0
      %v818 = vadd.f32 0.0, %v817
      %819 = vmatmul.bf16.gmra.mxu0 %v732
      %v820 = vpop.f32.mrf.mxu0
      %v821 = vadd.f32 0.0, %v820
      %v822 = vpop.f32.mrf.mxu0
      %v823 = vadd.f32 0.0, %v822
      %824 = vmatmul.bf16.gmra.mxu0 %v735
      %v825 = vpop.f32.mrf.mxu0
      %v826 = vadd.f32 0.0, %v825
      %v827 = vpop.f32.mrf.mxu0
      %v828 = vadd.f32 0.0, %v827
      %829 = vdwg.mxu0
      %v862 = vunpack.c.l.b16 %v196
      %v863 = vunpack.c.l.b16 %v197
      %v864 = vunpack.c.l.b16 %v199
      %v865 = vunpack.c.l.b16 %v200
      %v866 = vunpack.c.l.b16 %v202
      %v867 = vunpack.c.l.b16 %v203
      %v868 = vunpack.c.l.b16 %v205
      %v869 = vunpack.c.l.b16 %v206
      %v870 = vunpack.c.l.b16 %v208
      %v871 = vunpack.c.l.b16 %v209
      %v872 = vunpack.c.l.b16 %v211
      %v873 = vunpack.c.l.b16 %v212
      %v874 = vunpack.c.l.b16 %v214
      %v875 = vunpack.c.l.b16 %v215
      %v876 = vunpack.c.l.b16 %v217
      %v877 = vunpack.c.l.b16 %v218
      %v878 = vunpack.c.l.b16 %v220
      %v879 = vunpack.c.l.b16 %v221
      %v880 = vunpack.c.l.b16 %v223
      %v881 = vunpack.c.l.b16 %v224
      %v882 = vunpack.c.l.b16 %v226
      %v883 = vunpack.c.l.b16 %v227
      %v884 = vunpack.c.l.b16 %v229
      %v885 = vunpack.c.l.b16 %v230
      %v886 = vunpack.c.l.b16 %v232
      %v887 = vunpack.c.l.b16 %v233
      %v888 = vunpack.c.l.b16 %v235
      %v889 = vunpack.c.l.b16 %v236
      %v890 = vunpack.c.l.b16 %v238
      %v891 = vunpack.c.l.b16 %v239
      %v892 = vunpack.c.l.b16 %v241
      %v893 = vunpack.c.l.b16 %v242
      %v894 = vpack.c.b16 %v863, %v862
      %v895 = vpack.c.b16 %v865, %v864
      %v896 = vpack.c.b16 %v867, %v866
      %v897 = vpack.c.b16 %v869, %v868
      %v898 = vpack.c.b16 %v871, %v870
      %v899 = vpack.c.b16 %v873, %v872
      %v900 = vpack.c.b16 %v875, %v874
      %v901 = vpack.c.b16 %v877, %v876
      %v902 = vpack.c.b16 %v879, %v878
      %v903 = vpack.c.b16 %v881, %v880
      %v904 = vpack.c.b16 %v883, %v882
      %v905 = vpack.c.b16 %v885, %v884
      %v906 = vpack.c.b16 %v887, %v886
      %v907 = vpack.c.b16 %v889, %v888
      %v908 = vpack.c.b16 %v891, %v890
      %v909 = vpack.c.b16 %v893, %v892
      %v911 = vsel %vm688, %v894, 0
      %v914 = vsel %vm688, %v895, 0
      %v917 = vsel %vm688, %v896, 0
      %v920 = vsel %vm688, %v897, 0
      %v923 = vsel %vm688, %v898, 0
      %v926 = vsel %vm688, %v899, 0
      %v929 = vsel %vm688, %v900, 0
      %v932 = vsel %vm688, %v901, 0
      %v935 = vsel %vm688, %v902, 0
      %v938 = vsel %vm688, %v903, 0
      %v941 = vsel %vm688, %v904, 0
      %v944 = vsel %vm688, %v905, 0
      %v947 = vsel %vm688, %v906, 0
      %v950 = vsel %vm688, %v907, 0
      %v953 = vsel %vm688, %v908, 0
      %v956 = vsel %vm688, %v909, 0
      %v959 = vsel %vm737, %v250, 0
      %961 = vmatpush.bf16.msra.mxu0 0
      %962 = vmatpush.bf16.msra.mxu0 0
      %963 = vmatpush.bf16.msra.mxu0 0
      %964 = vmatpush.bf16.msra.mxu0 0
      %965 = vmatpush.bf16.msra.mxu0 0
      %966 = vmatpush.bf16.msra.mxu0 0
      %967 = vmatpush.bf16.msra.mxu0 0
      %968 = vmatpush.bf16.msra.mxu0 %v959
      %969 = vmatmul.bf16.gmra.mxu0 %v911
      %v970 = vpop.f32.mrf.mxu0
      %v971 = vadd.f32 %v751, %v970
      %v972 = vpop.f32.mrf.mxu0
      %v973 = vadd.f32 %v753, %v972
      %974 = vmatmul.bf16.gmra.mxu0 %v914
      %v975 = vpop.f32.mrf.mxu0
      %v976 = vadd.f32 %v756, %v975
      %v977 = vpop.f32.mrf.mxu0
      %v978 = vadd.f32 %v758, %v977
      %979 = vmatmul.bf16.gmra.mxu0 %v917
      %v980 = vpop.f32.mrf.mxu0
      %v981 = vadd.f32 %v761, %v980
      %v982 = vpop.f32.mrf.mxu0
      %v983 = vadd.f32 %v763, %v982
      %984 = vmatmul.bf16.gmra.mxu0 %v920
      %v985 = vpop.f32.mrf.mxu0
      %v986 = vadd.f32 %v766, %v985
      %v987 = vpop.f32.mrf.mxu0
      %v988 = vadd.f32 %v768, %v987
      %989 = vmatmul.bf16.gmra.mxu0 %v923
      %v990 = vpop.f32.mrf.mxu0
      %v991 = vadd.f32 %v771, %v990
      %v992 = vpop.f32.mrf.mxu0
      %v993 = vadd.f32 %v773, %v992
      %994 = vmatmul.bf16.gmra.mxu0 %v926
      %v995 = vpop.f32.mrf.mxu0
      %v996 = vadd.f32 %v776, %v995
      %v997 = vpop.f32.mrf.mxu0
      %v998 = vadd.f32 %v778, %v997
      %999 = vmatmul.bf16.gmra.mxu0 %v929
      %v1000 = vpop.f32.mrf.mxu0
      %v1001 = vadd.f32 %v781, %v1000
      %v1002 = vpop.f32.mrf.mxu0
      %v1003 = vadd.f32 %v783, %v1002
      %1004 = vmatmul.bf16.gmra.mxu0 %v932
      %v1005 = vpop.f32.mrf.mxu0
      %v1006 = vadd.f32 %v786, %v1005
      %v1007 = vpop.f32.mrf.mxu0
      %v1008 = vadd.f32 %v788, %v1007
      %1009 = vmatmul.bf16.gmra.mxu0 %v935
      %v1010 = vpop.f32.mrf.mxu0
      %v1011 = vadd.f32 %v791, %v1010
      %v1012 = vpop.f32.mrf.mxu0
      %v1013 = vadd.f32 %v793, %v1012
      %1014 = vmatmul.bf16.gmra.mxu0 %v938
      %v1015 = vpop.f32.mrf.mxu0
      %v1016 = vadd.f32 %v796, %v1015
      %v1017 = vpop.f32.mrf.mxu0
      %v1018 = vadd.f32 %v798, %v1017
      %1019 = vmatmul.bf16.gmra.mxu0 %v941
      %v1020 = vpop.f32.mrf.mxu0
      %v1021 = vadd.f32 %v801, %v1020
      %v1022 = vpop.f32.mrf.mxu0
      %v1023 = vadd.f32 %v803, %v1022
      %1024 = vmatmul.bf16.gmra.mxu0 %v944
      %v1025 = vpop.f32.mrf.mxu0
      %v1026 = vadd.f32 %v806, %v1025
      %v1027 = vpop.f32.mrf.mxu0
      %v1028 = vadd.f32 %v808, %v1027
      %1029 = vmatmul.bf16.gmra.mxu0 %v947
      %v1030 = vpop.f32.mrf.mxu0
      %v1031 = vadd.f32 %v811, %v1030
      %v1032 = vpop.f32.mrf.mxu0
      %v1033 = vadd.f32 %v813, %v1032
      %1034 = vmatmul.bf16.gmra.mxu0 %v950
      %v1035 = vpop.f32.mrf.mxu0
      %v1036 = vadd.f32 %v816, %v1035
      %v1037 = vpop.f32.mrf.mxu0
      %v1038 = vadd.f32 %v818, %v1037
      %1039 = vmatmul.bf16.gmra.mxu0 %v953
      %v1040 = vpop.f32.mrf.mxu0
      %v1041 = vadd.f32 %v821, %v1040
      %v1042 = vpop.f32.mrf.mxu0
      %v1043 = vadd.f32 %v823, %v1042
      %1044 = vmatmul.bf16.gmra.mxu0 %v956
      %v1045 = vpop.f32.mrf.mxu0
      %v1046 = vadd.f32 %v826, %v1045
      %v1047 = vpop.f32.mrf.mxu0
      %v1048 = vadd.f32 %v828, %v1047
      %1049 = vdwg.mxu0
      %vm1066 = vcmask 1042432
      %vm1067 = vcmask 1046532
      %vm1068 = vmor %vm1066, %vm1067
      %v1069 = vrot.slane %v196, 5
      %v1070 = vrot.slane %v1069, 4
      %v1071 = vrot.slane %v197, 5
      %v1072 = vsel %vm1068, %v1070, %v1071
      %v1073 = vrot.slane %v1071, 4
      %v1074 = vrot.slane %v198, 5
      %v1075 = vsel %vm1068, %v1073, %v1074
      %v1076 = vrot.slane %v199, 5
      %v1077 = vrot.slane %v1076, 4
      %v1078 = vrot.slane %v200, 5
      %v1079 = vsel %vm1068, %v1077, %v1078
      %v1080 = vrot.slane %v1078, 4
      %v1081 = vrot.slane %v201, 5
      %v1082 = vsel %vm1068, %v1080, %v1081
      %v1083 = vrot.slane %v202, 5
      %v1084 = vrot.slane %v1083, 4
      %v1085 = vrot.slane %v203, 5
      %v1086 = vsel %vm1068, %v1084, %v1085
      %v1087 = vrot.slane %v1085, 4
      %v1088 = vrot.slane %v204, 5
      %v1089 = vsel %vm1068, %v1087, %v1088
      %v1090 = vrot.slane %v205, 5
      %v1091 = vrot.slane %v1090, 4
      %v1092 = vrot.slane %v206, 5
      %v1093 = vsel %vm1068, %v1091, %v1092
      %v1094 = vrot.slane %v1092, 4
      %v1095 = vrot.slane %v207, 5
      %v1096 = vsel %vm1068, %v1094, %v1095
      %v1097 = vrot.slane %v208, 5
      %v1098 = vrot.slane %v1097, 4
      %v1099 = vrot.slane %v209, 5
      %v1100 = vsel %vm1068, %v1098, %v1099
      %v1101 = vrot.slane %v1099, 4
      %v1102 = vrot.slane %v210, 5
      %v1103 = vsel %vm1068, %v1101, %v1102
      %v1104 = vrot.slane %v211, 5
      %v1105 = vrot.slane %v1104, 4
      %v1106 = vrot.slane %v212, 5
      %v1107 = vsel %vm1068, %v1105, %v1106
      %v1108 = vrot.slane %v1106, 4
      %v1109 = vrot.slane %v213, 5
      %v1110 = vsel %vm1068, %v1108, %v1109
      %v1111 = vrot.slane %v214, 5
      %v1112 = vrot.slane %v1111, 4
      %v1113 = vrot.slane %v215, 5
      %v1114 = vsel %vm1068, %v1112, %v1113
      %v1115 = vrot.slane %v1113, 4
      %v1116 = vrot.slane %v216, 5
      %v1117 = vsel %vm1068, %v1115, %v1116
      %v1118 = vrot.slane %v217, 5
      %v1119 = vrot.slane %v1118, 4
      %v1120 = vrot.slane %v218, 5
      %v1121 = vsel %vm1068, %v1119, %v1120
      %v1122 = vrot.slane %v1120, 4
      %v1123 = vrot.slane %v219, 5
      %v1124 = vsel %vm1068, %v1122, %v1123
      %v1125 = vrot.slane %v220, 5
      %v1126 = vrot.slane %v1125, 4
      %v1127 = vrot.slane %v221, 5
      %v1128 = vsel %vm1068, %v1126, %v1127
      %v1129 = vrot.slane %v1127, 4
      %v1130 = vrot.slane %v222, 5
      %v1131 = vsel %vm1068, %v1129, %v1130
      %v1132 = vrot.slane %v223, 5
      %v1133 = vrot.slane %v1132, 4
      %v1134 = vrot.slane %v224, 5
      %v1135 = vsel %vm1068, %v1133, %v1134
      %v1136 = vrot.slane %v1134, 4
      %v1137 = vrot.slane %v225, 5
      %v1138 = vsel %vm1068, %v1136, %v1137
      %v1139 = vrot.slane %v226, 5
      %v1140 = vrot.slane %v1139, 4
      %v1141 = vrot.slane %v227, 5
      %v1142 = vsel %vm1068, %v1140, %v1141
      %v1143 = vrot.slane %v1141, 4
      %v1144 = vrot.slane %v228, 5
      %v1145 = vsel %vm1068, %v1143, %v1144
      %v1146 = vrot.slane %v229, 5
      %v1147 = vrot.slane %v1146, 4
      %v1148 = vrot.slane %v230, 5
      %v1149 = vsel %vm1068, %v1147, %v1148
      %v1150 = vrot.slane %v1148, 4
      %v1151 = vrot.slane %v231, 5
      %v1152 = vsel %vm1068, %v1150, %v1151
      %v1153 = vrot.slane %v232, 5
      %v1154 = vrot.slane %v1153, 4
      %v1155 = vrot.slane %v233, 5
      %v1156 = vsel %vm1068, %v1154, %v1155
      %v1157 = vrot.slane %v1155, 4
      %v1158 = vrot.slane %v234, 5
      %v1159 = vsel %vm1068, %v1157, %v1158
      %v1160 = vrot.slane %v235, 5
      %v1161 = vrot.slane %v1160, 4
      %v1162 = vrot.slane %v236, 5
      %v1163 = vsel %vm1068, %v1161, %v1162
      %v1164 = vrot.slane %v1162, 4
      %v1165 = vrot.slane %v237, 5
      %v1166 = vsel %vm1068, %v1164, %v1165
      %v1167 = vrot.slane %v238, 5
      %v1168 = vrot.slane %v1167, 4
      %v1169 = vrot.slane %v239, 5
      %v1170 = vsel %vm1068, %v1168, %v1169
      %v1171 = vrot.slane %v1169, 4
      %v1172 = vrot.slane %v240, 5
      %v1173 = vsel %vm1068, %v1171, %v1172
      %v1174 = vrot.slane %v241, 5
      %v1175 = vrot.slane %v1174, 4
      %v1176 = vrot.slane %v242, 5
      %v1177 = vsel %vm1068, %v1175, %v1176
      %v1178 = vrot.slane %v1176, 4
      %v1179 = vrot.slane %v243, 5
      %v1180 = vsel %vm1068, %v1178, %v1179
      %s1181 = scalar_lea.vmem %s1, 4
      %v1182 = vld [vmem:[%s1181] sm:$0x3]
      %v1183 = vunpack.c.l.b16 %v1072
      %v1184 = vunpack.c.l.b16 %v1075
      %v1185 = vunpack.c.l.b16 %v1079
      %v1186 = vunpack.c.l.b16 %v1082
      %v1187 = vunpack.c.l.b16 %v1086
      %v1188 = vunpack.c.l.b16 %v1089
      %v1189 = vunpack.c.l.b16 %v1093
      %v1190 = vunpack.c.l.b16 %v1096
      %v1191 = vunpack.c.l.b16 %v1100
      %v1192 = vunpack.c.l.b16 %v1103
      %v1193 = vunpack.c.l.b16 %v1107
      %v1194 = vunpack.c.l.b16 %v1110
      %v1195 = vunpack.c.l.b16 %v1114
      %v1196 = vunpack.c.l.b16 %v1117
      %v1197 = vunpack.c.l.b16 %v1121
      %v1198 = vunpack.c.l.b16 %v1124
      %v1199 = vunpack.c.l.b16 %v1128
      %v1200 = vunpack.c.l.b16 %v1131
      %v1201 = vunpack.c.l.b16 %v1135
      %v1202 = vunpack.c.l.b16 %v1138
      %v1203 = vunpack.c.l.b16 %v1142
      %v1204 = vunpack.c.l.b16 %v1145
      %v1205 = vunpack.c.l.b16 %v1149
      %v1206 = vunpack.c.l.b16 %v1152
      %v1207 = vunpack.c.l.b16 %v1156
      %v1208 = vunpack.c.l.b16 %v1159
      %v1209 = vunpack.c.l.b16 %v1163
      %v1210 = vunpack.c.l.b16 %v1166
      %v1211 = vunpack.c.l.b16 %v1170
      %v1212 = vunpack.c.l.b16 %v1173
      %v1213 = vunpack.c.l.b16 %v1177
      %v1214 = vunpack.c.l.b16 %v1180
      %v1215 = vpack.c.b16 %v1184, %v1183
      %v1216 = vpack.c.b16 %v1186, %v1185
      %v1217 = vpack.c.b16 %v1188, %v1187
      %v1218 = vpack.c.b16 %v1190, %v1189
      %v1219 = vpack.c.b16 %v1192, %v1191
      %v1220 = vpack.c.b16 %v1194, %v1193
      %v1221 = vpack.c.b16 %v1196, %v1195
      %v1222 = vpack.c.b16 %v1198, %v1197
      %v1223 = vpack.c.b16 %v1200, %v1199
      %v1224 = vpack.c.b16 %v1202, %v1201
      %v1225 = vpack.c.b16 %v1204, %v1203
      %v1226 = vpack.c.b16 %v1206, %v1205
      %v1227 = vpack.c.b16 %v1208, %v1207
      %v1228 = vpack.c.b16 %v1210, %v1209
      %v1229 = vpack.c.b16 %v1212, %v1211
      %v1230 = vpack.c.b16 %v1214, %v1213
      %v1232 = vsel %vm688, %v1215, 0
      %v1235 = vsel %vm688, %v1216, 0
      %v1238 = vsel %vm688, %v1217, 0
      %v1241 = vsel %vm688, %v1218, 0
      %v1244 = vsel %vm688, %v1219, 0
      %v1247 = vsel %vm688, %v1220, 0
      %v1250 = vsel %vm688, %v1221, 0
      %v1253 = vsel %vm688, %v1222, 0
      %v1256 = vsel %vm688, %v1223, 0
      %v1259 = vsel %vm688, %v1224, 0
      %v1262 = vsel %vm688, %v1225, 0
      %v1265 = vsel %vm688, %v1226, 0
      %v1268 = vsel %vm688, %v1227, 0
      %v1271 = vsel %vm688, %v1228, 0
      %v1274 = vsel %vm688, %v1229, 0
      %v1277 = vsel %vm688, %v1230, 0
      %v1280 = vsel %vm737, %v1182, 0
      %1282 = vmatpush.bf16.msra.mxu0 0
      %1283 = vmatpush.bf16.msra.mxu0 0
      %1284 = vmatpush.bf16.msra.mxu0 0
      %1285 = vmatpush.bf16.msra.mxu0 0
      %1286 = vmatpush.bf16.msra.mxu0 0
      %1287 = vmatpush.bf16.msra.mxu0 0
      %1288 = vmatpush.bf16.msra.mxu0 0
      %1289 = vmatpush.bf16.msra.mxu0 %v1280
      %1290 = vmatmul.bf16.gmra.mxu0 %v1232
      %v1291 = vpop.f32.mrf.mxu0
      %v1292 = vadd.f32 0.0, %v1291
      %v1293 = vpop.f32.mrf.mxu0
      %v1294 = vadd.f32 0.0, %v1293
      %1295 = vmatmul.bf16.gmra.mxu0 %v1235
      %v1296 = vpop.f32.mrf.mxu0
      %v1297 = vadd.f32 0.0, %v1296
      %v1298 = vpop.f32.mrf.mxu0
      %v1299 = vadd.f32 0.0, %v1298
      %1300 = vmatmul.bf16.gmra.mxu0 %v1238
      %v1301 = vpop.f32.mrf.mxu0
      %v1302 = vadd.f32 0.0, %v1301
      %v1303 = vpop.f32.mrf.mxu0
      %v1304 = vadd.f32 0.0, %v1303
      %1305 = vmatmul.bf16.gmra.mxu0 %v1241
      %v1306 = vpop.f32.mrf.mxu0
      %v1307 = vadd.f32 0.0, %v1306
      %v1308 = vpop.f32.mrf.mxu0
      %v1309 = vadd.f32 0.0, %v1308
      %1310 = vmatmul.bf16.gmra.mxu0 %v1244
      %v1311 = vpop.f32.mrf.mxu0
      %v1312 = vadd.f32 0.0, %v1311
      %v1313 = vpop.f32.mrf.mxu0
      %v1314 = vadd.f32 0.0, %v1313
      %1315 = vmatmul.bf16.gmra.mxu0 %v1247
      %v1316 = vpop.f32.mrf.mxu0
      %v1317 = vadd.f32 0.0, %v1316
      %v1318 = vpop.f32.mrf.mxu0
      %v1319 = vadd.f32 0.0, %v1318
      %1320 = vmatmul.bf16.gmra.mxu0 %v1250
      %v1321 = vpop.f32.mrf.mxu0
      %v1322 = vadd.f32 0.0, %v1321
      %v1323 = vpop.f32.mrf.mxu0
      %v1324 = vadd.f32 0.0, %v1323
      %1325 = vmatmul.bf16.gmra.mxu0 %v1253
      %v1326 = vpop.f32.mrf.mxu0
      %v1327 = vadd.f32 0.0, %v1326
      %v1328 = vpop.f32.mrf.mxu0
      %v1329 = vadd.f32 0.0, %v1328
      %1330 = vmatmul.bf16.gmra.mxu0 %v1256
      %v1331 = vpop.f32.mrf.mxu0
      %v1332 = vadd.f32 0.0, %v1331
      %v1333 = vpop.f32.mrf.mxu0
      %v1334 = vadd.f32 0.0, %v1333
      %1335 = vmatmul.bf16.gmra.mxu0 %v1259
      %v1336 = vpop.f32.mrf.mxu0
      %v1337 = vadd.f32 0.0, %v1336
      %v1338 = vpop.f32.mrf.mxu0
      %v1339 = vadd.f32 0.0, %v1338
      %1340 = vmatmul.bf16.gmra.mxu0 %v1262
      %v1341 = vpop.f32.mrf.mxu0
      %v1342 = vadd.f32 0.0, %v1341
      %v1343 = vpop.f32.mrf.mxu0
      %v1344 = vadd.f32 0.0, %v1343
      %1345 = vmatmul.bf16.gmra.mxu0 %v1265
      %v1346 = vpop.f32.mrf.mxu0
      %v1347 = vadd.f32 0.0, %v1346
      %v1348 = vpop.f32.mrf.mxu0
      %v1349 = vadd.f32 0.0, %v1348
      %1350 = vmatmul.bf16.gmra.mxu0 %v1268
      %v1351 = vpop.f32.mrf.mxu0
      %v1352 = vadd.f32 0.0, %v1351
      %v1353 = vpop.f32.mrf.mxu0
      %v1354 = vadd.f32 0.0, %v1353
      %1355 = vmatmul.bf16.gmra.mxu0 %v1271
      %v1356 = vpop.f32.mrf.mxu0
      %v1357 = vadd.f32 0.0, %v1356
      %v1358 = vpop.f32.mrf.mxu0
      %v1359 = vadd.f32 0.0, %v1358
      %1360 = vmatmul.bf16.gmra.mxu0 %v1274
      %v1361 = vpop.f32.mrf.mxu0
      %v1362 = vadd.f32 0.0, %v1361
      %v1363 = vpop.f32.mrf.mxu0
      %v1364 = vadd.f32 0.0, %v1363
      %1365 = vmatmul.bf16.gmra.mxu0 %v1277
      %v1366 = vpop.f32.mrf.mxu0
      %v1367 = vadd.f32 0.0, %v1366
      %v1368 = vpop.f32.mrf.mxu0
      %v1369 = vadd.f32 0.0, %v1368
      %1370 = vdwg.mxu0
      %v1371 = vadd.f32 %v971, %v1292
      %v1372 = vadd.f32 %v973, %v1294
      %v1373 = vadd.f32 %v976, %v1297
      %v1374 = vadd.f32 %v978, %v1299
      %v1375 = vadd.f32 %v981, %v1302
      %v1376 = vadd.f32 %v983, %v1304
      %v1377 = vadd.f32 %v986, %v1307
      %v1378 = vadd.f32 %v988, %v1309
      %v1379 = vadd.f32 %v991, %v1312
      %v1380 = vadd.f32 %v993, %v1314
      %v1381 = vadd.f32 %v996, %v1317
      %v1382 = vadd.f32 %v998, %v1319
      %v1383 = vadd.f32 %v1001, %v1322
      %v1384 = vadd.f32 %v1003, %v1324
      %v1385 = vadd.f32 %v1006, %v1327
      %v1386 = vadd.f32 %v1008, %v1329
      %v1387 = vadd.f32 %v1011, %v1332
      %v1388 = vadd.f32 %v1013, %v1334
      %v1389 = vadd.f32 %v1016, %v1337
      %v1390 = vadd.f32 %v1018, %v1339
      %v1391 = vadd.f32 %v1021, %v1342
      %v1392 = vadd.f32 %v1023, %v1344
      %v1393 = vadd.f32 %v1026, %v1347
      %v1394 = vadd.f32 %v1028, %v1349
      %v1395 = vadd.f32 %v1031, %v1352
      %v1396 = vadd.f32 %v1033, %v1354
      %v1397 = vadd.f32 %v1036, %v1357
      %v1398 = vadd.f32 %v1038, %v1359
      %v1399 = vadd.f32 %v1041, %v1362
      %v1400 = vadd.f32 %v1043, %v1364
      %v1401 = vadd.f32 %v1046, %v1367
      %v1402 = vadd.f32 %v1048, %v1369
      %s1403 = scalar_lea.vmem %s1, 6
      %v1404 = vld [vmem:[%s1403] sm:$0x3]
      %v1407 = vunpack.c.l.b16 %v244
      %v1408 = vunpack.c.l.b16 %v245
      %v1409 = vpack.c.b16 %v1408, %v1407
      %v1411 = vsel %vm688, %v1409, 0
      %v1414 = vsel %vm737, %v1404, 0
      %1416 = vmatpush.bf16.msra.mxu0 0
      %1417 = vmatpush.bf16.msra.mxu0 0
      %1418 = vmatpush.bf16.msra.mxu0 0
      %1419 = vmatpush.bf16.msra.mxu0 0
      %1420 = vmatpush.bf16.msra.mxu0 0
      %1421 = vmatpush.bf16.msra.mxu0 0
      %1422 = vmatpush.bf16.msra.mxu0 0
      %1423 = vmatpush.bf16.msra.mxu0 %v1414
      %1424 = vmatmul.bf16.gmra.mxu0 %v914
      %v1425 = vpop.f32.mrf.mxu0
      %v1426 = vadd.f32 0.0, %v1425
      %v1427 = vpop.f32.mrf.mxu0
      %v1428 = vadd.f32 0.0, %v1427
      %1429 = vmatmul.bf16.gmra.mxu0 %v917
      %v1430 = vpop.f32.mrf.mxu0
      %v1431 = vadd.f32 0.0, %v1430
      %v1432 = vpop.f32.mrf.mxu0
      %v1433 = vadd.f32 0.0, %v1432
      %1434 = vmatmul.bf16.gmra.mxu0 %v920
      %v1435 = vpop.f32.mrf.mxu0
      %v1436 = vadd.f32 0.0, %v1435
      %v1437 = vpop.f32.mrf.mxu0
      %v1438 = vadd.f32 0.0, %v1437
      %1439 = vmatmul.bf16.gmra.mxu0 %v923
      %v1440 = vpop.f32.mrf.mxu0
      %v1441 = vadd.f32 0.0, %v1440
      %v1442 = vpop.f32.mrf.mxu0
      %v1443 = vadd.f32 0.0, %v1442
      %1444 = vmatmul.bf16.gmra.mxu0 %v926
      %v1445 = vpop.f32.mrf.mxu0
      %v1446 = vadd.f32 0.0, %v1445
      %v1447 = vpop.f32.mrf.mxu0
      %v1448 = vadd.f32 0.0, %v1447
      %1449 = vmatmul.bf16.gmra.mxu0 %v929
      %v1450 = vpop.f32.mrf.mxu0
      %v1451 = vadd.f32 0.0, %v1450
      %v1452 = vpop.f32.mrf.mxu0
      %v1453 = vadd.f32 0.0, %v1452
      %1454 = vmatmul.bf16.gmra.mxu0 %v932
      %v1455 = vpop.f32.mrf.mxu0
      %v1456 = vadd.f32 0.0, %v1455
      %v1457 = vpop.f32.mrf.mxu0
      %v1458 = vadd.f32 0.0, %v1457
      %1459 = vmatmul.bf16.gmra.mxu0 %v935
      %v1460 = vpop.f32.mrf.mxu0
      %v1461 = vadd.f32 0.0, %v1460
      %v1462 = vpop.f32.mrf.mxu0
      %v1463 = vadd.f32 0.0, %v1462
      %1464 = vmatmul.bf16.gmra.mxu0 %v938
      %v1465 = vpop.f32.mrf.mxu0
      %v1466 = vadd.f32 0.0, %v1465
      %v1467 = vpop.f32.mrf.mxu0
      %v1468 = vadd.f32 0.0, %v1467
      %1469 = vmatmul.bf16.gmra.mxu0 %v941
      %v1470 = vpop.f32.mrf.mxu0
      %v1471 = vadd.f32 0.0, %v1470
      %v1472 = vpop.f32.mrf.mxu0
      %v1473 = vadd.f32 0.0, %v1472
      %1474 = vmatmul.bf16.gmra.mxu0 %v944
      %v1475 = vpop.f32.mrf.mxu0
      %v1476 = vadd.f32 0.0, %v1475
      %v1477 = vpop.f32.mrf.mxu0
      %v1478 = vadd.f32 0.0, %v1477
      %1479 = vmatmul.bf16.gmra.mxu0 %v947
      %v1480 = vpop.f32.mrf.mxu0
      %v1481 = vadd.f32 0.0, %v1480
      %v1482 = vpop.f32.mrf.mxu0
      %v1483 = vadd.f32 0.0, %v1482
      %1484 = vmatmul.bf16.gmra.mxu0 %v950
      %v1485 = vpop.f32.mrf.mxu0
      %v1486 = vadd.f32 0.0, %v1485
      %v1487 = vpop.f32.mrf.mxu0
      %v1488 = vadd.f32 0.0, %v1487
      %1489 = vmatmul.bf16.gmra.mxu0 %v953
      %v1490 = vpop.f32.mrf.mxu0
      %v1491 = vadd.f32 0.0, %v1490
      %v1492 = vpop.f32.mrf.mxu0
      %v1493 = vadd.f32 0.0, %v1492
      %1494 = vmatmul.bf16.gmra.mxu0 %v956
      %v1495 = vpop.f32.mrf.mxu0
      %v1496 = vadd.f32 0.0, %v1495
      %v1497 = vpop.f32.mrf.mxu0
      %v1498 = vadd.f32 0.0, %v1497
      %1499 = vmatmul.bf16.gmra.mxu0 %v1411
      %v1500 = vpop.f32.mrf.mxu0
      %v1501 = vadd.f32 0.0, %v1500
      %v1502 = vpop.f32.mrf.mxu0
      %v1503 = vadd.f32 0.0, %v1502
      %1504 = vdwg.mxu0
      %v1505 = vadd.f32 %v1371, %v1426
      %v1506 = vadd.f32 %v1372, %v1428
      %v1507 = vadd.f32 %v1373, %v1431
      %v1508 = vadd.f32 %v1374, %v1433
      %v1509 = vadd.f32 %v1375, %v1436
      %v1510 = vadd.f32 %v1376, %v1438
      %v1511 = vadd.f32 %v1377, %v1441
      %v1512 = vadd.f32 %v1378, %v1443
      %v1513 = vadd.f32 %v1379, %v1446
      %v1514 = vadd.f32 %v1380, %v1448
      %v1515 = vadd.f32 %v1381, %v1451
      %v1516 = vadd.f32 %v1382, %v1453
      %v1517 = vadd.f32 %v1383, %v1456
      %v1518 = vadd.f32 %v1384, %v1458
      %v1519 = vadd.f32 %v1385, %v1461
      %v1520 = vadd.f32 %v1386, %v1463
      %v1521 = vadd.f32 %v1387, %v1466
      %v1522 = vadd.f32 %v1388, %v1468
      %v1523 = vadd.f32 %v1389, %v1471
      %v1524 = vadd.f32 %v1390, %v1473
      %v1525 = vadd.f32 %v1391, %v1476
      %v1526 = vadd.f32 %v1392, %v1478
      %v1527 = vadd.f32 %v1393, %v1481
      %v1528 = vadd.f32 %v1394, %v1483
      %v1529 = vadd.f32 %v1395, %v1486
      %v1530 = vadd.f32 %v1396, %v1488
      %v1531 = vadd.f32 %v1397, %v1491
      %v1532 = vadd.f32 %v1398, %v1493
      %v1533 = vadd.f32 %v1399, %v1496
      %v1534 = vadd.f32 %v1400, %v1498
      %v1535 = vadd.f32 %v1401, %v1501
      %v1536 = vadd.f32 %v1402, %v1503
      %v1538 = vshrl.u32 %v244, 16
      %v1540 = vrot.slane %v1538, 4
      %v1541 = vshll.u32 %v244, 16
      %v1543 = vrot.slane %v1541, 5
      %v1544 = vor.u32 %v1540, %v1543
      %v1545 = vrot.slane %v1544, 4
      %v1547 = vshll.u32 %v245, 16
      %v1549 = vrot.slane %v1547, 5
      %v1550 = vsel %vm253, %v1545, %v1549
      %v1551 = vshrl.u32 %v245, 16
      %v1553 = vrot.slane %v1551, 4
      %v1554 = vor.u32 %v1553, %v1549
      %v1555 = vrot.slane %v1554, 4
      %v1557 = vshll.u32 %v246, 16
      %v1559 = vrot.slane %v1557, 5
      %v1560 = vsel %vm253, %v1555, %v1559
      %s1561 = scalar_lea.vmem %s1, 8
      %v1562 = vld [vmem:[%s1561] sm:$0x3]
      %v1563 = vunpack.c.l.b16 %v1550
      %v1564 = vunpack.c.l.b16 %v1560
      %v1565 = vpack.c.b16 %v1564, %v1563
      %v1567 = vsel %vm688, %v1565, 0
      %v1570 = vsel %vm737, %v1562, 0
      %1572 = vmatpush.bf16.msra.mxu0 0
      %1573 = vmatpush.bf16.msra.mxu0 0
      %1574 = vmatpush.bf16.msra.mxu0 0
      %1575 = vmatpush.bf16.msra.mxu0 0
      %1576 = vmatpush.bf16.msra.mxu0 0
      %1577 = vmatpush.bf16.msra.mxu0 0
      %1578 = vmatpush.bf16.msra.mxu0 0
      %1579 = vmatpush.bf16.msra.mxu0 %v1570
      %1580 = vmatmul.bf16.gmra.mxu0 %v693
      %v1581 = vpop.f32.mrf.mxu0
      %v1582 = vadd.f32 0.0, %v1581
      %v1583 = vpop.f32.mrf.mxu0
      %v1584 = vadd.f32 0.0, %v1583
      %1585 = vmatmul.bf16.gmra.mxu0 %v696
      %v1586 = vpop.f32.mrf.mxu0
      %v1587 = vadd.f32 0.0, %v1586
      %v1588 = vpop.f32.mrf.mxu0
      %v1589 = vadd.f32 0.0, %v1588
      %1590 = vmatmul.bf16.gmra.mxu0 %v699
      %v1591 = vpop.f32.mrf.mxu0
      %v1592 = vadd.f32 0.0, %v1591
      %v1593 = vpop.f32.mrf.mxu0
      %v1594 = vadd.f32 0.0, %v1593
      %1595 = vmatmul.bf16.gmra.mxu0 %v702
      %v1596 = vpop.f32.mrf.mxu0
      %v1597 = vadd.f32 0.0, %v1596
      %v1598 = vpop.f32.mrf.mxu0
      %v1599 = vadd.f32 0.0, %v1598
      %1600 = vmatmul.bf16.gmra.mxu0 %v705
      %v1601 = vpop.f32.mrf.mxu0
      %v1602 = vadd.f32 0.0, %v1601
      %v1603 = vpop.f32.mrf.mxu0
      %v1604 = vadd.f32 0.0, %v1603
      %1605 = vmatmul.bf16.gmra.mxu0 %v708
      %v1606 = vpop.f32.mrf.mxu0
      %v1607 = vadd.f32 0.0, %v1606
      %v1608 = vpop.f32.mrf.mxu0
      %v1609 = vadd.f32 0.0, %v1608
      %1610 = vmatmul.bf16.gmra.mxu0 %v711
      %v1611 = vpop.f32.mrf.mxu0
      %v1612 = vadd.f32 0.0, %v1611
      %v1613 = vpop.f32.mrf.mxu0
      %v1614 = vadd.f32 0.0, %v1613
      %1615 = vmatmul.bf16.gmra.mxu0 %v714
      %v1616 = vpop.f32.mrf.mxu0
      %v1617 = vadd.f32 0.0, %v1616
      %v1618 = vpop.f32.mrf.mxu0
      %v1619 = vadd.f32 0.0, %v1618
      %1620 = vmatmul.bf16.gmra.mxu0 %v717
      %v1621 = vpop.f32.mrf.mxu0
      %v1622 = vadd.f32 0.0, %v1621
      %v1623 = vpop.f32.mrf.mxu0
      %v1624 = vadd.f32 0.0, %v1623
      %1625 = vmatmul.bf16.gmra.mxu0 %v720
      %v1626 = vpop.f32.mrf.mxu0
      %v1627 = vadd.f32 0.0, %v1626
      %v1628 = vpop.f32.mrf.mxu0
      %v1629 = vadd.f32 0.0, %v1628
      %1630 = vmatmul.bf16.gmra.mxu0 %v723
      %v1631 = vpop.f32.mrf.mxu0
      %v1632 = vadd.f32 0.0, %v1631
      %v1633 = vpop.f32.mrf.mxu0
      %v1634 = vadd.f32 0.0, %v1633
      %1635 = vmatmul.bf16.gmra.mxu0 %v726
      %v1636 = vpop.f32.mrf.mxu0
      %v1637 = vadd.f32 0.0, %v1636
      %v1638 = vpop.f32.mrf.mxu0
      %v1639 = vadd.f32 0.0, %v1638
      %1640 = vmatmul.bf16.gmra.mxu0 %v729
      %v1641 = vpop.f32.mrf.mxu0
      %v1642 = vadd.f32 0.0, %v1641
      %v1643 = vpop.f32.mrf.mxu0
      %v1644 = vadd.f32 0.0, %v1643
      %1645 = vmatmul.bf16.gmra.mxu0 %v732
      %v1646 = vpop.f32.mrf.mxu0
      %v1647 = vadd.f32 0.0, %v1646
      %v1648 = vpop.f32.mrf.mxu0
      %v1649 = vadd.f32 0.0, %v1648
      %1650 = vmatmul.bf16.gmra.mxu0 %v735
      %v1651 = vpop.f32.mrf.mxu0
      %v1652 = vadd.f32 0.0, %v1651
      %v1653 = vpop.f32.mrf.mxu0
      %v1654 = vadd.f32 0.0, %v1653
      %1655 = vmatmul.bf16.gmra.mxu0 %v1567
      %v1656 = vpop.f32.mrf.mxu0
      %v1657 = vadd.f32 0.0, %v1656
      %v1658 = vpop.f32.mrf.mxu0
      %v1659 = vadd.f32 0.0, %v1658
      %1660 = vdwg.mxu0
      %v1661 = vadd.f32 %v1505, %v1582
      %v1662 = vadd.f32 %v1506, %v1584
      %v1663 = vadd.f32 %v1507, %v1587
      %v1664 = vadd.f32 %v1508, %v1589
      %v1665 = vadd.f32 %v1509, %v1592
      %v1666 = vadd.f32 %v1510, %v1594
      %v1667 = vadd.f32 %v1511, %v1597
      %v1668 = vadd.f32 %v1512, %v1599
      %v1669 = vadd.f32 %v1513, %v1602
      %v1670 = vadd.f32 %v1514, %v1604
      %v1671 = vadd.f32 %v1515, %v1607
      %v1672 = vadd.f32 %v1516, %v1609
      %v1673 = vadd.f32 %v1517, %v1612
      %v1674 = vadd.f32 %v1518, %v1614
      %v1675 = vadd.f32 %v1519, %v1617
      %v1676 = vadd.f32 %v1520, %v1619
      %v1677 = vadd.f32 %v1521, %v1622
      %v1678 = vadd.f32 %v1522, %v1624
      %v1679 = vadd.f32 %v1523, %v1627
      %v1680 = vadd.f32 %v1524, %v1629
      %v1681 = vadd.f32 %v1525, %v1632
      %v1682 = vadd.f32 %v1526, %v1634
      %v1683 = vadd.f32 %v1527, %v1637
      %v1684 = vadd.f32 %v1528, %v1639
      %v1685 = vadd.f32 %v1529, %v1642
      %v1686 = vadd.f32 %v1530, %v1644
      %v1687 = vadd.f32 %v1531, %v1647
      %v1688 = vadd.f32 %v1532, %v1649
      %v1689 = vadd.f32 %v1533, %v1652
      %v1690 = vadd.f32 %v1534, %v1654
      %v1691 = vadd.f32 %v1535, %v1657
      %v1692 = vadd.f32 %v1536, %v1659
      %v1694 = vrot.slane %v244, 5
      %v1695 = vrot.slane %v1694, 4
      %v1696 = vrot.slane %v245, 5
      %v1697 = vsel %vm1068, %v1695, %v1696
      %v1698 = vrot.slane %v1696, 4
      %v1699 = vrot.slane %v246, 5
      %v1700 = vsel %vm1068, %v1698, %v1699
      %s1701 = scalar_lea.vmem %s1, 10
      %v1702 = vld [vmem:[%s1701] sm:$0x3]
      %v1703 = vunpack.c.l.b16 %v1697
      %v1704 = vunpack.c.l.b16 %v1700
      %v1705 = vpack.c.b16 %v1704, %v1703
      %v1707 = vsel %vm688, %v1705, 0
      %v1710 = vsel %vm737, %v1702, 0
      %1712 = vmatpush.bf16.msra.mxu0 0
      %1713 = vmatpush.bf16.msra.mxu0 0
      %1714 = vmatpush.bf16.msra.mxu0 0
      %1715 = vmatpush.bf16.msra.mxu0 0
      %1716 = vmatpush.bf16.msra.mxu0 0
      %1717 = vmatpush.bf16.msra.mxu0 0
      %1718 = vmatpush.bf16.msra.mxu0 0
      %1719 = vmatpush.bf16.msra.mxu0 %v1710
      %1720 = vmatmul.bf16.gmra.mxu0 %v1235
      %v1721 = vpop.f32.mrf.mxu0
      %v1722 = vadd.f32 0.0, %v1721
      %v1723 = vpop.f32.mrf.mxu0
      %v1724 = vadd.f32 0.0, %v1723
      %1725 = vmatmul.bf16.gmra.mxu0 %v1238
      %v1726 = vpop.f32.mrf.mxu0
      %v1727 = vadd.f32 0.0, %v1726
      %v1728 = vpop.f32.mrf.mxu0
      %v1729 = vadd.f32 0.0, %v1728
      %1730 = vmatmul.bf16.gmra.mxu0 %v1241
      %v1731 = vpop.f32.mrf.mxu0
      %v1732 = vadd.f32 0.0, %v1731
      %v1733 = vpop.f32.mrf.mxu0
      %v1734 = vadd.f32 0.0, %v1733
      %1735 = vmatmul.bf16.gmra.mxu0 %v1244
      %v1736 = vpop.f32.mrf.mxu0
      %v1737 = vadd.f32 0.0, %v1736
      %v1738 = vpop.f32.mrf.mxu0
      %v1739 = vadd.f32 0.0, %v1738
      %1740 = vmatmul.bf16.gmra.mxu0 %v1247
      %v1741 = vpop.f32.mrf.mxu0
      %v1742 = vadd.f32 0.0, %v1741
      %v1743 = vpop.f32.mrf.mxu0
      %v1744 = vadd.f32 0.0, %v1743
      %1745 = vmatmul.bf16.gmra.mxu0 %v1250
      %v1746 = vpop.f32.mrf.mxu0
      %v1747 = vadd.f32 0.0, %v1746
      %v1748 = vpop.f32.mrf.mxu0
      %v1749 = vadd.f32 0.0, %v1748
      %1750 = vmatmul.bf16.gmra.mxu0 %v1253
      %v1751 = vpop.f32.mrf.mxu0
      %v1752 = vadd.f32 0.0, %v1751
      %v1753 = vpop.f32.mrf.mxu0
      %v1754 = vadd.f32 0.0, %v1753
      %1755 = vmatmul.bf16.gmra.mxu0 %v1256
      %v1756 = vpop.f32.mrf.mxu0
      %v1757 = vadd.f32 0.0, %v1756
      %v1758 = vpop.f32.mrf.mxu0
      %v1759 = vadd.f32 0.0, %v1758
      %1760 = vmatmul.bf16.gmra.mxu0 %v1259
      %v1761 = vpop.f32.mrf.mxu0
      %v1762 = vadd.f32 0.0, %v1761
      %v1763 = vpop.f32.mrf.mxu0
      %v1764 = vadd.f32 0.0, %v1763
      %1765 = vmatmul.bf16.gmra.mxu0 %v1262
      %v1766 = vpop.f32.mrf.mxu0
      %v1767 = vadd.f32 0.0, %v1766
      %v1768 = vpop.f32.mrf.mxu0
      %v1769 = vadd.f32 0.0, %v1768
      %1770 = vmatmul.bf16.gmra.mxu0 %v1265
      %v1771 = vpop.f32.mrf.mxu0
      %v1772 = vadd.f32 0.0, %v1771
      %v1773 = vpop.f32.mrf.mxu0
      %v1774 = vadd.f32 0.0, %v1773
      %1775 = vmatmul.bf16.gmra.mxu0 %v1268
      %v1776 = vpop.f32.mrf.mxu0
      %v1777 = vadd.f32 0.0, %v1776
      %v1778 = vpop.f32.mrf.mxu0
      %v1779 = vadd.f32 0.0, %v1778
      %1780 = vmatmul.bf16.gmra.mxu0 %v1271
      %v1781 = vpop.f32.mrf.mxu0
      %v1782 = vadd.f32 0.0, %v1781
      %v1783 = vpop.f32.mrf.mxu0
      %v1784 = vadd.f32 0.0, %v1783
      %1785 = vmatmul.bf16.gmra.mxu0 %v1274
      %v1786 = vpop.f32.mrf.mxu0
      %v1787 = vadd.f32 0.0, %v1786
      %v1788 = vpop.f32.mrf.mxu0
      %v1789 = vadd.f32 0.0, %v1788
      %1790 = vmatmul.bf16.gmra.mxu0 %v1277
      %v1791 = vpop.f32.mrf.mxu0
      %v1792 = vadd.f32 0.0, %v1791
      %v1793 = vpop.f32.mrf.mxu0
      %v1794 = vadd.f32 0.0, %v1793
      %1795 = vmatmul.bf16.gmra.mxu0 %v1707
      %v1796 = vpop.f32.mrf.mxu0
      %v1797 = vadd.f32 0.0, %v1796
      %v1798 = vpop.f32.mrf.mxu0
      %v1799 = vadd.f32 0.0, %v1798
      %1800 = vdwg.mxu0
      %v1801 = vadd.f32 %v1661, %v1722
      %v1802 = vadd.f32 %v1662, %v1724
      %v1803 = vadd.f32 %v1663, %v1727
      %v1804 = vadd.f32 %v1664, %v1729
      %v1805 = vadd.f32 %v1665, %v1732
      %v1806 = vadd.f32 %v1666, %v1734
      %v1807 = vadd.f32 %v1667, %v1737
      %v1808 = vadd.f32 %v1668, %v1739
      %v1809 = vadd.f32 %v1669, %v1742
      %v1810 = vadd.f32 %v1670, %v1744
      %v1811 = vadd.f32 %v1671, %v1747
      %v1812 = vadd.f32 %v1672, %v1749
      %v1813 = vadd.f32 %v1673, %v1752
      %v1814 = vadd.f32 %v1674, %v1754
      %v1815 = vadd.f32 %v1675, %v1757
      %v1816 = vadd.f32 %v1676, %v1759
      %v1817 = vadd.f32 %v1677, %v1762
      %v1818 = vadd.f32 %v1678, %v1764
      %v1819 = vadd.f32 %v1679, %v1767
      %v1820 = vadd.f32 %v1680, %v1769
      %v1821 = vadd.f32 %v1681, %v1772
      %v1822 = vadd.f32 %v1682, %v1774
      %v1823 = vadd.f32 %v1683, %v1777
      %v1824 = vadd.f32 %v1684, %v1779
      %v1825 = vadd.f32 %v1685, %v1782
      %v1826 = vadd.f32 %v1686, %v1784
      %v1827 = vadd.f32 %v1687, %v1787
      %v1828 = vadd.f32 %v1688, %v1789
      %v1829 = vadd.f32 %v1689, %v1792
      %v1830 = vadd.f32 %v1690, %v1794
      %v1831 = vadd.f32 %v1691, %v1797
      %v1832 = vadd.f32 %v1692, %v1799
      %s1833 = scalar_lea.vmem %s1, 12
      %v1834 = vld [vmem:[%s1833] sm:$0x3]
      %v1837 = vunpack.c.l.b16 %v247
      %v1838 = vunpack.c.l.b16 %v248
      %v1839 = vpack.c.b16 %v1838, %v1837
      %v1841 = vsel %vm688, %v1839, 0
      %v1844 = vsel %vm737, %v1834, 0
      %1846 = vmatpush.bf16.msra.mxu0 0
      %1847 = vmatpush.bf16.msra.mxu0 0
      %1848 = vmatpush.bf16.msra.mxu0 0
      %1849 = vmatpush.bf16.msra.mxu0 0
      %1850 = vmatpush.bf16.msra.mxu0 0
      %1851 = vmatpush.bf16.msra.mxu0 0
      %1852 = vmatpush.bf16.msra.mxu0 0
      %1853 = vmatpush.bf16.msra.mxu0 %v1844
      %1854 = vmatmul.bf16.gmra.mxu0 %v917
      %v1855 = vpop.f32.mrf.mxu0
      %v1856 = vadd.f32 0.0, %v1855
      %v1857 = vpop.f32.mrf.mxu0
      %v1858 = vadd.f32 0.0, %v1857
      %1859 = vmatmul.bf16.gmra.mxu0 %v920
      %v1860 = vpop.f32.mrf.mxu0
      %v1861 = vadd.f32 0.0, %v1860
      %v1862 = vpop.f32.mrf.mxu0
      %v1863 = vadd.f32 0.0, %v1862
      %1864 = vmatmul.bf16.gmra.mxu0 %v923
      %v1865 = vpop.f32.mrf.mxu0
      %v1866 = vadd.f32 0.0, %v1865
      %v1867 = vpop.f32.mrf.mxu0
      %v1868 = vadd.f32 0.0, %v1867
      %1869 = vmatmul.bf16.gmra.mxu0 %v926
      %v1870 = vpop.f32.mrf.mxu0
      %v1871 = vadd.f32 0.0, %v1870
      %v1872 = vpop.f32.mrf.mxu0
      %v1873 = vadd.f32 0.0, %v1872
      %1874 = vmatmul.bf16.gmra.mxu0 %v929
      %v1875 = vpop.f32.mrf.mxu0
      %v1876 = vadd.f32 0.0, %v1875
      %v1877 = vpop.f32.mrf.mxu0
      %v1878 = vadd.f32 0.0, %v1877
      %1879 = vmatmul.bf16.gmra.mxu0 %v932
      %v1880 = vpop.f32.mrf.mxu0
      %v1881 = vadd.f32 0.0, %v1880
      %v1882 = vpop.f32.mrf.mxu0
      %v1883 = vadd.f32 0.0, %v1882
      %1884 = vmatmul.bf16.gmra.mxu0 %v935
      %v1885 = vpop.f32.mrf.mxu0
      %v1886 = vadd.f32 0.0, %v1885
      %v1887 = vpop.f32.mrf.mxu0
      %v1888 = vadd.f32 0.0, %v1887
      %1889 = vmatmul.bf16.gmra.mxu0 %v938
      %v1890 = vpop.f32.mrf.mxu0
      %v1891 = vadd.f32 0.0, %v1890
      %v1892 = vpop.f32.mrf.mxu0
      %v1893 = vadd.f32 0.0, %v1892
      %1894 = vmatmul.bf16.gmra.mxu0 %v941
      %v1895 = vpop.f32.mrf.mxu0
      %v1896 = vadd.f32 0.0, %v1895
      %v1897 = vpop.f32.mrf.mxu0
      %v1898 = vadd.f32 0.0, %v1897
      %1899 = vmatmul.bf16.gmra.mxu0 %v944
      %v1900 = vpop.f32.mrf.mxu0
      %v1901 = vadd.f32 0.0, %v1900
      %v1902 = vpop.f32.mrf.mxu0
      %v1903 = vadd.f32 0.0, %v1902
      %1904 = vmatmul.bf16.gmra.mxu0 %v947
      %v1905 = vpop.f32.mrf.mxu0
      %v1906 = vadd.f32 0.0, %v1905
      %v1907 = vpop.f32.mrf.mxu0
      %v1908 = vadd.f32 0.0, %v1907
      %1909 = vmatmul.bf16.gmra.mxu0 %v950
      %v1910 = vpop.f32.mrf.mxu0
      %v1911 = vadd.f32 0.0, %v1910
      %v1912 = vpop.f32.mrf.mxu0
      %v1913 = vadd.f32 0.0, %v1912
      %1914 = vmatmul.bf16.gmra.mxu0 %v953
      %v1915 = vpop.f32.mrf.mxu0
      %v1916 = vadd.f32 0.0, %v1915
      %v1917 = vpop.f32.mrf.mxu0
      %v1918 = vadd.f32 0.0, %v1917
      %1919 = vmatmul.bf16.gmra.mxu0 %v956
      %v1920 = vpop.f32.mrf.mxu0
      %v1921 = vadd.f32 0.0, %v1920
      %v1922 = vpop.f32.mrf.mxu0
      %v1923 = vadd.f32 0.0, %v1922
      %1924 = vmatmul.bf16.gmra.mxu0 %v1411
      %v1925 = vpop.f32.mrf.mxu0
      %v1926 = vadd.f32 0.0, %v1925
      %v1927 = vpop.f32.mrf.mxu0
      %v1928 = vadd.f32 0.0, %v1927
      %1929 = vmatmul.bf16.gmra.mxu0 %v1841
      %v1930 = vpop.f32.mrf.mxu0
      %v1931 = vadd.f32 0.0, %v1930
      %v1932 = vpop.f32.mrf.mxu0
      %v1933 = vadd.f32 0.0, %v1932
      %1934 = vdwg.mxu0
      %v1935 = vadd.f32 %v1801, %v1856
      %v1936 = vadd.f32 %v1802, %v1858
      %v1937 = vadd.f32 %v1803, %v1861
      %v1938 = vadd.f32 %v1804, %v1863
      %v1939 = vadd.f32 %v1805, %v1866
      %v1940 = vadd.f32 %v1806, %v1868
      %v1941 = vadd.f32 %v1807, %v1871
      %v1942 = vadd.f32 %v1808, %v1873
      %v1943 = vadd.f32 %v1809, %v1876
      %v1944 = vadd.f32 %v1810, %v1878
      %v1945 = vadd.f32 %v1811, %v1881
      %v1946 = vadd.f32 %v1812, %v1883
      %v1947 = vadd.f32 %v1813, %v1886
      %v1948 = vadd.f32 %v1814, %v1888
      %v1949 = vadd.f32 %v1815, %v1891
      %v1950 = vadd.f32 %v1816, %v1893
      %v1951 = vadd.f32 %v1817, %v1896
      %v1952 = vadd.f32 %v1818, %v1898
      %v1953 = vadd.f32 %v1819, %v1901
      %v1954 = vadd.f32 %v1820, %v1903
      %v1955 = vadd.f32 %v1821, %v1906
      %v1956 = vadd.f32 %v1822, %v1908
      %v1957 = vadd.f32 %v1823, %v1911
      %v1958 = vadd.f32 %v1824, %v1913
      %v1959 = vadd.f32 %v1825, %v1916
      %v1960 = vadd.f32 %v1826, %v1918
      %v1961 = vadd.f32 %v1827, %v1921
      %v1962 = vadd.f32 %v1828, %v1923
      %v1963 = vadd.f32 %v1829, %v1926
      %v1964 = vadd.f32 %v1830, %v1928
      %v1965 = vadd.f32 %v1831, %v1931
      %v1966 = vadd.f32 %v1832, %v1933
      %v1968 = vshrl.u32 %v247, 16
      %v1970 = vrot.slane %v1968, 4
      %v1971 = vshll.u32 %v247, 16
      %v1973 = vrot.slane %v1971, 5
      %v1974 = vor.u32 %v1970, %v1973
      %v1975 = vrot.slane %v1974, 4
      %v1977 = vshll.u32 %v248, 16
      %v1979 = vrot.slane %v1977, 5
      %v1980 = vsel %vm253, %v1975, %v1979
      %v1981 = vshrl.u32 %v248, 16
      %v1983 = vrot.slane %v1981, 4
      %v1984 = vor.u32 %v1983, %v1979
      %v1985 = vrot.slane %v1984, 4
      %v1987 = vshll.u32 %v249, 16
      %v1989 = vrot.slane %v1987, 5
      %v1990 = vsel %vm253, %v1985, %v1989
      %s1991 = scalar_lea.vmem %s1, 14
      %v1992 = vld [vmem:[%s1991] sm:$0x3]
      %v1993 = vunpack.c.l.b16 %v1980
      %v1994 = vunpack.c.l.b16 %v1990
      %v1995 = vpack.c.b16 %v1994, %v1993
      %v1997 = vsel %vm688, %v1995, 0
      %v2000 = vsel %vm737, %v1992, 0
      %2002 = vmatpush.bf16.msra.mxu0 0
      %2003 = vmatpush.bf16.msra.mxu0 0
      %2004 = vmatpush.bf16.msra.mxu0 0
      %2005 = vmatpush.bf16.msra.mxu0 0
      %2006 = vmatpush.bf16.msra.mxu0 0
      %2007 = vmatpush.bf16.msra.mxu0 0
      %2008 = vmatpush.bf16.msra.mxu0 0
      %2009 = vmatpush.bf16.msra.mxu0 %v2000
      %2010 = vmatmul.bf16.gmra.mxu0 %v696
      %v2011 = vpop.f32.mrf.mxu0
      %v2012 = vadd.f32 0.0, %v2011
      %v2013 = vpop.f32.mrf.mxu0
      %v2014 = vadd.f32 0.0, %v2013
      %2015 = vmatmul.bf16.gmra.mxu0 %v699
      %v2016 = vpop.f32.mrf.mxu0
      %v2017 = vadd.f32 0.0, %v2016
      %v2018 = vpop.f32.mrf.mxu0
      %v2019 = vadd.f32 0.0, %v2018
      %2020 = vmatmul.bf16.gmra.mxu0 %v702
      %v2021 = vpop.f32.mrf.mxu0
      %v2022 = vadd.f32 0.0, %v2021
      %v2023 = vpop.f32.mrf.mxu0
      %v2024 = vadd.f32 0.0, %v2023
      %2025 = vmatmul.bf16.gmra.mxu0 %v705
      %v2026 = vpop.f32.mrf.mxu0
      %v2027 = vadd.f32 0.0, %v2026
      %v2028 = vpop.f32.mrf.mxu0
      %v2029 = vadd.f32 0.0, %v2028
      %2030 = vmatmul.bf16.gmra.mxu0 %v708
      %v2031 = vpop.f32.mrf.mxu0
      %v2032 = vadd.f32 0.0, %v2031
      %v2033 = vpop.f32.mrf.mxu0
      %v2034 = vadd.f32 0.0, %v2033
      %2035 = vmatmul.bf16.gmra.mxu0 %v711
      %v2036 = vpop.f32.mrf.mxu0
      %v2037 = vadd.f32 0.0, %v2036
      %v2038 = vpop.f32.mrf.mxu0
      %v2039 = vadd.f32 0.0, %v2038
      %2040 = vmatmul.bf16.gmra.mxu0 %v714
      %v2041 = vpop.f32.mrf.mxu0
      %v2042 = vadd.f32 0.0, %v2041
      %v2043 = vpop.f32.mrf.mxu0
      %v2044 = vadd.f32 0.0, %v2043
      %2045 = vmatmul.bf16.gmra.mxu0 %v717
      %v2046 = vpop.f32.mrf.mxu0
      %v2047 = vadd.f32 0.0, %v2046
      %v2048 = vpop.f32.mrf.mxu0
      %v2049 = vadd.f32 0.0, %v2048
      %2050 = vmatmul.bf16.gmra.mxu0 %v720
      %v2051 = vpop.f32.mrf.mxu0
      %v2052 = vadd.f32 0.0, %v2051
      %v2053 = vpop.f32.mrf.mxu0
      %v2054 = vadd.f32 0.0, %v2053
      %2055 = vmatmul.bf16.gmra.mxu0 %v723
      %v2056 = vpop.f32.mrf.mxu0
      %v2057 = vadd.f32 0.0, %v2056
      %v2058 = vpop.f32.mrf.mxu0
      %v2059 = vadd.f32 0.0, %v2058
      %2060 = vmatmul.bf16.gmra.mxu0 %v726
      %v2061 = vpop.f32.mrf.mxu0
      %v2062 = vadd.f32 0.0, %v2061
      %v2063 = vpop.f32.mrf.mxu0
      %v2064 = vadd.f32 0.0, %v2063
      %2065 = vmatmul.bf16.gmra.mxu0 %v729
      %v2066 = vpop.f32.mrf.mxu0
      %v2067 = vadd.f32 0.0, %v2066
      %v2068 = vpop.f32.mrf.mxu0
      %v2069 = vadd.f32 0.0, %v2068
      %2070 = vmatmul.bf16.gmra.mxu0 %v732
      %v2071 = vpop.f32.mrf.mxu0
      %v2072 = vadd.f32 0.0, %v2071
      %v2073 = vpop.f32.mrf.mxu0
      %v2074 = vadd.f32 0.0, %v2073
      %2075 = vmatmul.bf16.gmra.mxu0 %v735
      %v2076 = vpop.f32.mrf.mxu0
      %v2077 = vadd.f32 0.0, %v2076
      %v2078 = vpop.f32.mrf.mxu0
      %v2079 = vadd.f32 0.0, %v2078
      %2080 = vmatmul.bf16.gmra.mxu0 %v1567
      %v2081 = vpop.f32.mrf.mxu0
      %v2082 = vadd.f32 0.0, %v2081
      %v2083 = vpop.f32.mrf.mxu0
      %v2084 = vadd.f32 0.0, %v2083
      %2085 = vmatmul.bf16.gmra.mxu0 %v1997
      %v2086 = vpop.f32.mrf.mxu0
      %v2087 = vadd.f32 0.0, %v2086
      %v2088 = vpop.f32.mrf.mxu0
      %v2089 = vadd.f32 0.0, %v2088
      %2090 = vdwg.mxu0
      %v2091 = vadd.f32 %v1935, %v2012
      %v2092 = vadd.f32 %v1936, %v2014
      %v2093 = vadd.f32 %v1937, %v2017
      %v2094 = vadd.f32 %v1938, %v2019
      %v2095 = vadd.f32 %v1939, %v2022
      %v2096 = vadd.f32 %v1940, %v2024
      %v2097 = vadd.f32 %v1941, %v2027
      %v2098 = vadd.f32 %v1942, %v2029
      %v2099 = vadd.f32 %v1943, %v2032
      %v2100 = vadd.f32 %v1944, %v2034
      %v2101 = vadd.f32 %v1945, %v2037
      %v2102 = vadd.f32 %v1946, %v2039
      %v2103 = vadd.f32 %v1947, %v2042
      %v2104 = vadd.f32 %v1948, %v2044
      %v2105 = vadd.f32 %v1949, %v2047
      %v2106 = vadd.f32 %v1950, %v2049
      %v2107 = vadd.f32 %v1951, %v2052
      %v2108 = vadd.f32 %v1952, %v2054
      %v2109 = vadd.f32 %v1953, %v2057
      %v2110 = vadd.f32 %v1954, %v2059
      %v2111 = vadd.f32 %v1955, %v2062
      %v2112 = vadd.f32 %v1956, %v2064
      %v2113 = vadd.f32 %v1957, %v2067
      %v2114 = vadd.f32 %v1958, %v2069
      %v2115 = vadd.f32 %v1959, %v2072
      %v2116 = vadd.f32 %v1960, %v2074
      %v2117 = vadd.f32 %v1961, %v2077
      %v2118 = vadd.f32 %v1962, %v2079
      %v2119 = vadd.f32 %v1963, %v2082
      %v2120 = vadd.f32 %v1964, %v2084
      %v2121 = vadd.f32 %v1965, %v2087
      %v2122 = vadd.f32 %v1966, %v2089
      %v2124 = vrot.slane %v247, 5
      %v2125 = vrot.slane %v2124, 4
      %v2126 = vrot.slane %v248, 5
      %v2127 = vsel %vm1068, %v2125, %v2126
      %v2128 = vrot.slane %v2126, 4
      %v2129 = vrot.slane %v249, 5
      %v2130 = vsel %vm1068, %v2128, %v2129
      %s2131 = scalar_lea.vmem %s1, 16
      %v2132 = vld [vmem:[%s2131] sm:$0x3]
      %v2133 = vunpack.c.l.b16 %v2127
      %v2134 = vunpack.c.l.b16 %v2130
      %v2135 = vpack.c.b16 %v2134, %v2133
      %v2137 = vsel %vm688, %v2135, 0
      %v2140 = vsel %vm737, %v2132, 0
      %2142 = vmatpush.bf16.msra.mxu0 0
      %2143 = vmatpush.bf16.msra.mxu0 0
      %2144 = vmatpush.bf16.msra.mxu0 0
      %2145 = vmatpush.bf16.msra.mxu0 0
      %2146 = vmatpush.bf16.msra.mxu0 0
      %2147 = vmatpush.bf16.msra.mxu0 0
      %2148 = vmatpush.bf16.msra.mxu0 0
      %2149 = vmatpush.bf16.msra.mxu0 %v2140
      %2150 = vmatmul.bf16.gmra.mxu0 %v1238
      %v2151 = vpop.f32.mrf.mxu0
      %v2152 = vadd.f32 0.0, %v2151
      %v2153 = vpop.f32.mrf.mxu0
      %v2154 = vadd.f32 0.0, %v2153
      %2155 = vmatmul.bf16.gmra.mxu0 %v1241
      %v2156 = vpop.f32.mrf.mxu0
      %v2157 = vadd.f32 0.0, %v2156
      %v2158 = vpop.f32.mrf.mxu0
      %v2159 = vadd.f32 0.0, %v2158
      %2160 = vmatmul.bf16.gmra.mxu0 %v1244
      %v2161 = vpop.f32.mrf.mxu0
      %v2162 = vadd.f32 0.0, %v2161
      %v2163 = vpop.f32.mrf.mxu0
      %v2164 = vadd.f32 0.0, %v2163
      %2165 = vmatmul.bf16.gmra.mxu0 %v1247
      %v2166 = vpop.f32.mrf.mxu0
      %v2167 = vadd.f32 0.0, %v2166
      %v2168 = vpop.f32.mrf.mxu0
      %v2169 = vadd.f32 0.0, %v2168
      %2170 = vmatmul.bf16.gmra.mxu0 %v1250
      %v2171 = vpop.f32.mrf.mxu0
      %v2172 = vadd.f32 0.0, %v2171
      %v2173 = vpop.f32.mrf.mxu0
      %v2174 = vadd.f32 0.0, %v2173
      %2175 = vmatmul.bf16.gmra.mxu0 %v1253
      %v2176 = vpop.f32.mrf.mxu0
      %v2177 = vadd.f32 0.0, %v2176
      %v2178 = vpop.f32.mrf.mxu0
      %v2179 = vadd.f32 0.0, %v2178
      %2180 = vmatmul.bf16.gmra.mxu0 %v1256
      %v2181 = vpop.f32.mrf.mxu0
      %v2182 = vadd.f32 0.0, %v2181
      %v2183 = vpop.f32.mrf.mxu0
      %v2184 = vadd.f32 0.0, %v2183
      %2185 = vmatmul.bf16.gmra.mxu0 %v1259
      %v2186 = vpop.f32.mrf.mxu0
      %v2187 = vadd.f32 0.0, %v2186
      %v2188 = vpop.f32.mrf.mxu0
      %v2189 = vadd.f32 0.0, %v2188
      %2190 = vmatmul.bf16.gmra.mxu0 %v1262
      %v2191 = vpop.f32.mrf.mxu0
      %v2192 = vadd.f32 0.0, %v2191
      %v2193 = vpop.f32.mrf.mxu0
      %v2194 = vadd.f32 0.0, %v2193
      %2195 = vmatmul.bf16.gmra.mxu0 %v1265
      %v2196 = vpop.f32.mrf.mxu0
      %v2197 = vadd.f32 0.0, %v2196
      %v2198 = vpop.f32.mrf.mxu0
      %v2199 = vadd.f32 0.0, %v2198
      %2200 = vmatmul.bf16.gmra.mxu0 %v1268
      %v2201 = vpop.f32.mrf.mxu0
      %v2202 = vadd.f32 0.0, %v2201
      %v2203 = vpop.f32.mrf.mxu0
      %v2204 = vadd.f32 0.0, %v2203
      %2205 = vmatmul.bf16.gmra.mxu0 %v1271
      %v2206 = vpop.f32.mrf.mxu0
      %v2207 = vadd.f32 0.0, %v2206
      %v2208 = vpop.f32.mrf.mxu0
      %v2209 = vadd.f32 0.0, %v2208
      %2210 = vmatmul.bf16.gmra.mxu0 %v1274
      %v2211 = vpop.f32.mrf.mxu0
      %v2212 = vadd.f32 0.0, %v2211
      %v2213 = vpop.f32.mrf.mxu0
      %v2214 = vadd.f32 0.0, %v2213
      %2215 = vmatmul.bf16.gmra.mxu0 %v1277
      %v2216 = vpop.f32.mrf.mxu0
      %v2217 = vadd.f32 0.0, %v2216
      %v2218 = vpop.f32.mrf.mxu0
      %v2219 = vadd.f32 0.0, %v2218
      %2220 = vmatmul.bf16.gmra.mxu0 %v1707
      %v2221 = vpop.f32.mrf.mxu0
      %v2222 = vadd.f32 0.0, %v2221
      %v2223 = vpop.f32.mrf.mxu0
      %v2224 = vadd.f32 0.0, %v2223
      %2225 = vmatmul.bf16.gmra.mxu0 %v2137
      %v2226 = vpop.f32.mrf.mxu0
      %v2227 = vadd.f32 0.0, %v2226
      %v2228 = vpop.f32.mrf.mxu0
      %v2229 = vadd.f32 0.0, %v2228
      %2230 = vdwg.mxu0
      %v2231 = vadd.f32 %v2091, %v2152
      %v2232 = vadd.f32 %v2092, %v2154
      %v2233 = vadd.f32 %v2093, %v2157
      %v2234 = vadd.f32 %v2094, %v2159
      %v2235 = vadd.f32 %v2095, %v2162
      %v2236 = vadd.f32 %v2096, %v2164
      %v2237 = vadd.f32 %v2097, %v2167
      %v2238 = vadd.f32 %v2098, %v2169
      %v2239 = vadd.f32 %v2099, %v2172
      %v2240 = vadd.f32 %v2100, %v2174
      %v2241 = vadd.f32 %v2101, %v2177
      %v2242 = vadd.f32 %v2102, %v2179
      %v2243 = vadd.f32 %v2103, %v2182
      %v2244 = vadd.f32 %v2104, %v2184
      %v2245 = vadd.f32 %v2105, %v2187
      %v2246 = vadd.f32 %v2106, %v2189
      %v2247 = vadd.f32 %v2107, %v2192
      %v2248 = vadd.f32 %v2108, %v2194
      %v2249 = vadd.f32 %v2109, %v2197
      %v2250 = vadd.f32 %v2110, %v2199
      %v2251 = vadd.f32 %v2111, %v2202
      %v2252 = vadd.f32 %v2112, %v2204
      %v2253 = vadd.f32 %v2113, %v2207
      %v2254 = vadd.f32 %v2114, %v2209
      %v2255 = vadd.f32 %v2115, %v2212
      %v2256 = vadd.f32 %v2116, %v2214
      %v2257 = vadd.f32 %v2117, %v2217
      %v2258 = vadd.f32 %v2118, %v2219
      %v2259 = vadd.f32 %v2119, %v2222
      %v2260 = vadd.f32 %v2120, %v2224
      %v2261 = vadd.f32 %v2121, %v2227
      %v2262 = vadd.f32 %v2122, %v2229
      // Predicated region
      $region33: #{conv_block_forward.1} parent=27 // pred_check
        %p2263 = pneg %p188
      $region34: #{conv_block_forward.1} parent=27 // pred_check_branch
        %2265 = sbr.rel (%p2263) target = $region36
      $region35: #{conv_block_forward.1} parent=27 // pred_region
        %v2266 = vld [vmem:[#allocation2] sm:$0x1]
        %v2267 = vadd.f32 %v2231, %v2232
        %v2268 = vadd.f32 %v2267, %v2233
        %v2269 = vadd.f32 %v2268, %v2234
        %v2270 = vadd.f32 %v2269, %v2235
        %v2271 = vadd.f32 %v2270, %v2236
        %v2272 = vadd.f32 %v2271, %v2237
        %v2273 = vadd.f32 %v2272, %v2238
        %v2274 = vadd.f32 %v2273, %v2239
        %v2275 = vadd.f32 %v2274, %v2240
        %v2276 = vadd.f32 %v2275, %v2241
        %v2277 = vadd.f32 %v2276, %v2242
        %v2278 = vadd.f32 %v2277, %v2243
        %v2279 = vadd.f32 %v2278, %v2244
        %v2280 = vadd.f32 %v2279, %v2245
        %v2281 = vadd.f32 %v2280, %v2246
        %v2282 = vadd.f32 %v2281, %v2247
        %v2283 = vadd.f32 %v2282, %v2248
        %v2284 = vadd.f32 %v2283, %v2249
        %v2285 = vadd.f32 %v2284, %v2250
        %v2286 = vadd.f32 %v2285, %v2251
        %v2287 = vadd.f32 %v2286, %v2252
        %v2288 = vadd.f32 %v2287, %v2253
        %v2289 = vadd.f32 %v2288, %v2254
        %v2290 = vadd.f32 %v2289, %v2255
        %v2291 = vadd.f32 %v2290, %v2256
        %v2292 = vadd.f32 %v2291, %v2257
        %v2293 = vadd.f32 %v2292, %v2258
        %v2294 = vadd.f32 %v2293, %v2259
        %v2295 = vadd.f32 %v2294, %v2260
        %v2296 = vadd.f32 %v2295, %v2261
        %v2297 = vadd.f32 %v2296, %v2262
        %v2298 = vrot.slane %v2297, 4
        %v2299 = vadd.f32 %v2297, %v2298
        %v2300 = vrot.slane %v2299, 2
        %v2301 = vadd.f32 %v2299, %v2300
        %v2302 = vrot.slane %v2301, 1
        %v2303 = vadd.f32 %v2301, %v2302
        %v2304 = vadd.f32 %v2266, %v2303
        %2305 = vst [vmem:[#allocation2] sm:$0x1] %v2304
        %v2306 = vld [vmem:[#allocation3] sm:$0x1]
        %v2307 = vmul.f32 %v2231, %v2231
        %v2308 = vmul.f32 %v2232, %v2232
        %v2309 = vmul.f32 %v2233, %v2233
        %v2310 = vmul.f32 %v2234, %v2234
        %v2311 = vmul.f32 %v2235, %v2235
        %v2312 = vmul.f32 %v2236, %v2236
        %v2313 = vmul.f32 %v2237, %v2237
        %v2314 = vmul.f32 %v2238, %v2238
        %v2315 = vmul.f32 %v2239, %v2239
        %v2316 = vmul.f32 %v2240, %v2240
        %v2317 = vmul.f32 %v2241, %v2241
        %v2318 = vmul.f32 %v2242, %v2242
        %v2319 = vmul.f32 %v2243, %v2243
        %v2320 = vmul.f32 %v2244, %v2244
        %v2321 = vmul.f32 %v2245, %v2245
        %v2322 = vmul.f32 %v2246, %v2246
        %v2323 = vmul.f32 %v2247, %v2247
        %v2324 = vmul.f32 %v2248, %v2248
        %v2325 = vmul.f32 %v2249, %v2249
        %v2326 = vmul.f32 %v2250, %v2250
        %v2327 = vmul.f32 %v2251, %v2251
        %v2328 = vmul.f32 %v2252, %v2252
        %v2329 = vmul.f32 %v2253, %v2253
        %v2330 = vmul.f32 %v2254, %v2254
        %v2331 = vmul.f32 %v2255, %v2255
        %v2332 = vmul.f32 %v2256, %v2256
        %v2333 = vmul.f32 %v2257, %v2257
        %v2334 = vmul.f32 %v2258, %v2258
        %v2335 = vmul.f32 %v2259, %v2259
        %v2336 = vmul.f32 %v2260, %v2260
        %v2337 = vmul.f32 %v2261, %v2261
        %v2338 = vmul.f32 %v2262, %v2262
        %v2339 = vadd.f32 %v2307, %v2308
        %v2340 = vadd.f32 %v2339, %v2309
        %v2341 = vadd.f32 %v2340, %v2310
        %v2342 = vadd.f32 %v2341, %v2311
        %v2343 = vadd.f32 %v2342, %v2312
        %v2344 = vadd.f32 %v2343, %v2313
        %v2345 = vadd.f32 %v2344, %v2314
        %v2346 = vadd.f32 %v2345, %v2315
        %v2347 = vadd.f32 %v2346, %v2316
        %v2348 = vadd.f32 %v2347, %v2317
        %v2349 = vadd.f32 %v2348, %v2318
        %v2350 = vadd.f32 %v2349, %v2319
        %v2351 = vadd.f32 %v2350, %v2320
        %v2352 = vadd.f32 %v2351, %v2321
        %v2353 = vadd.f32 %v2352, %v2322
        %v2354 = vadd.f32 %v2353, %v2323
        %v2355 = vadd.f32 %v2354, %v2324
        %v2356 = vadd.f32 %v2355, %v2325
        %v2357 = vadd.f32 %v2356, %v2326
        %v2358 = vadd.f32 %v2357, %v2327
        %v2359 = vadd.f32 %v2358, %v2328
        %v2360 = vadd.f32 %v2359, %v2329
        %v2361 = vadd.f32 %v2360, %v2330
        %v2362 = vadd.f32 %v2361, %v2331
        %v2363 = vadd.f32 %v2362, %v2332
        %v2364 = vadd.f32 %v2363, %v2333
        %v2365 = vadd.f32 %v2364, %v2334
        %v2366 = vadd.f32 %v2365, %v2335
        %v2367 = vadd.f32 %v2366, %v2336
        %v2368 = vadd.f32 %v2367, %v2337
        %v2369 = vadd.f32 %v2368, %v2338
        %v2370 = vrot.slane %v2369, 4
        %v2371 = vadd.f32 %v2369, %v2370
        %v2372 = vrot.slane %v2371, 2
        %v2373 = vadd.f32 %v2371, %v2372
        %v2374 = vrot.slane %v2373, 1
        %v2375 = vadd.f32 %v2373, %v2374
        %v2376 = vadd.f32 %v2306, %v2375
        %2377 = vst [vmem:[#allocation3] sm:$0x1] %v2376
        %v2378 = vld [vmem:[#allocation2] sm:$0x1]
        %v2379 = vmul.f32 %v2378, 0.00390625
        %v2380 = vld [vmem:[#allocation3] sm:$0x1]
        %v2381 = vmul.f32 %v2380, 0.00390625
        %v2382 = vmul.f32 %v2379, %v2379
        %v2383 = vsub.f32 %v2381, %v2382
        %v2384 = vmax.f32 %v2383, 0.0
        %v2385 = vadd.f32 %v2384, 1e-05
        %v2386 = vrsqrt.pop %v2385
        %v2387 = vmul.f32 %v2386, %v2385
        %v2388 = vmul.f32 %v2387, %v2386
        %v2389 = vmul.f32 0.5, %v2388
        %v2390 = vsub.f32 1.5, %v2389
        %v2391 = vmul.f32 %v2386, %v2390
        %vm2392 = vweird.f32 %v2385
        %vm2393 = vweird.f32 %v2386
        %vm2394 = vmor %vm2392, %vm2393
        %v2395 = vsel %vm2394, %v2386, %v2391
        %v2397 = vperm.slane %v2379, 0
        %v2399 = vsub.f32 %v2231, %v2397
        %v2400 = vsub.f32 %v2232, %v2397
        %v2401 = vsub.f32 %v2233, %v2397
        %v2402 = vsub.f32 %v2234, %v2397
        %v2403 = vsub.f32 %v2235, %v2397
        %v2404 = vsub.f32 %v2236, %v2397
        %v2405 = vsub.f32 %v2237, %v2397
        %v2406 = vsub.f32 %v2238, %v2397
        %v2407 = vsub.f32 %v2239, %v2397
        %v2408 = vsub.f32 %v2240, %v2397
        %v2409 = vsub.f32 %v2241, %v2397
        %v2410 = vsub.f32 %v2242, %v2397
        %v2411 = vsub.f32 %v2243, %v2397
        %v2412 = vsub.f32 %v2244, %v2397
        %v2413 = vsub.f32 %v2245, %v2397
        %v2414 = vsub.f32 %v2246, %v2397
        %v2415 = vsub.f32 %v2247, %v2397
        %v2416 = vsub.f32 %v2248, %v2397
        %v2417 = vsub.f32 %v2249, %v2397
        %v2418 = vsub.f32 %v2250, %v2397
        %v2419 = vsub.f32 %v2251, %v2397
        %v2420 = vsub.f32 %v2252, %v2397
        %v2421 = vsub.f32 %v2253, %v2397
        %v2422 = vsub.f32 %v2254, %v2397
        %v2423 = vsub.f32 %v2255, %v2397
        %v2424 = vsub.f32 %v2256, %v2397
        %v2425 = vsub.f32 %v2257, %v2397
        %v2426 = vsub.f32 %v2258, %v2397
        %v2427 = vsub.f32 %v2259, %v2397
        %v2428 = vsub.f32 %v2260, %v2397
        %v2429 = vsub.f32 %v2261, %v2397
        %v2430 = vsub.f32 %v2262, %v2397
        %v2432 = vperm.slane %v2395, 0
        %v2434 = vmul.f32 %v2399, %v2432
        %v2435 = vmul.f32 %v2400, %v2432
        %v2436 = vmul.f32 %v2401, %v2432
        %v2437 = vmul.f32 %v2402, %v2432
        %v2438 = vmul.f32 %v2403, %v2432
        %v2439 = vmul.f32 %v2404, %v2432
        %v2440 = vmul.f32 %v2405, %v2432
        %v2441 = vmul.f32 %v2406, %v2432
        %v2442 = vmul.f32 %v2407, %v2432
        %v2443 = vmul.f32 %v2408, %v2432
        %v2444 = vmul.f32 %v2409, %v2432
        %v2445 = vmul.f32 %v2410, %v2432
        %v2446 = vmul.f32 %v2411, %v2432
        %v2447 = vmul.f32 %v2412, %v2432
        %v2448 = vmul.f32 %v2413, %v2432
        %v2449 = vmul.f32 %v2414, %v2432
        %v2450 = vmul.f32 %v2415, %v2432
        %v2451 = vmul.f32 %v2416, %v2432
        %v2452 = vmul.f32 %v2417, %v2432
        %v2453 = vmul.f32 %v2418, %v2432
        %v2454 = vmul.f32 %v2419, %v2432
        %v2455 = vmul.f32 %v2420, %v2432
        %v2456 = vmul.f32 %v2421, %v2432
        %v2457 = vmul.f32 %v2422, %v2432
        %v2458 = vmul.f32 %v2423, %v2432
        %v2459 = vmul.f32 %v2424, %v2432
        %v2460 = vmul.f32 %v2425, %v2432
        %v2461 = vmul.f32 %v2426, %v2432
        %v2462 = vmul.f32 %v2427, %v2432
        %v2463 = vmul.f32 %v2428, %v2432
        %v2464 = vmul.f32 %v2429, %v2432
        %v2465 = vmul.f32 %v2430, %v2432
        %v2466 = vmax.f32 %v2434, 0.0
        %v2467 = vmax.f32 %v2435, 0.0
        %v2468 = vmax.f32 %v2436, 0.0
        %v2469 = vmax.f32 %v2437, 0.0
        %v2470 = vmax.f32 %v2438, 0.0
        %v2471 = vmax.f32 %v2439, 0.0
        %v2472 = vmax.f32 %v2440, 0.0
        %v2473 = vmax.f32 %v2441, 0.0
        %v2474 = vmax.f32 %v2442, 0.0
        %v2475 = vmax.f32 %v2443, 0.0
        %v2476 = vmax.f32 %v2444, 0.0
        %v2477 = vmax.f32 %v2445, 0.0
        %v2478 = vmax.f32 %v2446, 0.0
        %v2479 = vmax.f32 %v2447, 0.0
        %v2480 = vmax.f32 %v2448, 0.0
        %v2481 = vmax.f32 %v2449, 0.0
        %v2482 = vmax.f32 %v2450, 0.0
        %v2483 = vmax.f32 %v2451, 0.0
        %v2484 = vmax.f32 %v2452, 0.0
        %v2485 = vmax.f32 %v2453, 0.0
        %v2486 = vmax.f32 %v2454, 0.0
        %v2487 = vmax.f32 %v2455, 0.0
        %v2488 = vmax.f32 %v2456, 0.0
        %v2489 = vmax.f32 %v2457, 0.0
        %v2490 = vmax.f32 %v2458, 0.0
        %v2491 = vmax.f32 %v2459, 0.0
        %v2492 = vmax.f32 %v2460, 0.0
        %v2493 = vmax.f32 %v2461, 0.0
        %v2494 = vmax.f32 %v2462, 0.0
        %v2495 = vmax.f32 %v2463, 0.0
        %v2496 = vmax.f32 %v2464, 0.0
        %v2497 = vmax.f32 %v2465, 0.0
        %2498 = vst [vmem:[%s186] sm:$0xff] %v2466
        %2499 = vst [vmem:[%s186 + $0x8] sm:$0xff] %v2467
        %2500 = vst [vmem:[%s186 + $0x10] sm:$0xff] %v2468
        %2501 = vst [vmem:[%s186 + $0x18] sm:$0xff] %v2469
        %2502 = vst [vmem:[%s186 + $0x20] sm:$0xff] %v2470
        %2503 = vst [vmem:[%s186 + $0x28] sm:$0xff] %v2471
        %2504 = vst [vmem:[%s186 + $0x30] sm:$0xff] %v2472
        %2505 = vst [vmem:[%s186 + $0x38] sm:$0xff] %v2473
        %2506 = vst [vmem:[%s186 + $0x40] sm:$0xff] %v2474
        %2507 = vst [vmem:[%s186 + $0x48] sm:$0xff] %v2475
        %2508 = vst [vmem:[%s186 + $0x50] sm:$0xff] %v2476
        %2509 = vst [vmem:[%s186 + $0x58] sm:$0xff] %v2477
        %2510 = vst [vmem:[%s186 + $0x60] sm:$0xff] %v2478
        %2511 = vst [vmem:[%s186 + $0x68] sm:$0xff] %v2479
        %2512 = vst [vmem:[%s186 + $0x70] sm:$0xff] %v2480
        %2513 = vst [vmem:[%s186 + $0x78] sm:$0xff] %v2481
        %2514 = vst [vmem:[%s186 + $0x80] sm:$0xff] %v2482
        %2515 = vst [vmem:[%s186 + $0x88] sm:$0xff] %v2483
        %2516 = vst [vmem:[%s186 + $0x90] sm:$0xff] %v2484
        %2517 = vst [vmem:[%s186 + $0x98] sm:$0xff] %v2485
        %2518 = vst [vmem:[%s186 + $0xa0] sm:$0xff] %v2486
        %2519 = vst [vmem:[%s186 + $0xa8] sm:$0xff] %v2487
        %2520 = vst [vmem:[%s186 + $0xb0] sm:$0xff] %v2488
        %2521 = vst [vmem:[%s186 + $0xb8] sm:$0xff] %v2489
        %2522 = vst [vmem:[%s186 + $0xc0] sm:$0xff] %v2490
        %2523 = vst [vmem:[%s186 + $0xc8] sm:$0xff] %v2491
        %2524 = vst [vmem:[%s186 + $0xd0] sm:$0xff] %v2492
        %2525 = vst [vmem:[%s186 + $0xd8] sm:$0xff] %v2493
        %2526 = vst [vmem:[%s186 + $0xe0] sm:$0xff] %v2494
        %2527 = vst [vmem:[%s186 + $0xe8] sm:$0xff] %v2495
        %2528 = vst [vmem:[%s186 + $0xf0] sm:$0xff] %v2496
        %2529 = vst [vmem:[%s186 + $0xf8] sm:$0xff] %v2497
      $region36: #{conv_block_forward.1} parent=27 // pred_fallthru
        _
      %p2530 = scmp.lt.s32.totalorder %s18, 1
      %s2531 = scalar_select %p2530, %s18, 1
      %p2532 = scmp.lt.s32.totalorder %s20, 0
      %s2533 = scalar_select %p2532, %s20, 0
      %s2534 = smul.addr %s2533, 32
      %s2535 = smul.addr %s2531, 32
      %s2536 = sadd.s32 %s2534, %s2535
      %s2537 = smul.addr %s2536, 8
      %s2538 = scalar_lea.vmem %s2, %s2537
      // Predicated region
      $region37: #{conv_block_forward.1} parent=27 // pred_check
        %p2539 = pneg %p101
      $region38: #{conv_block_forward.1} parent=27 // pred_check_branch
        %2541 = sbr.rel (%p2539) target = $region40
      $region39: #{conv_block_forward.1} parent=27 // pred_region
        _
      $region40: #{conv_block_forward.1} parent=27 // pred_fallthru
        _
    $region28: #{conv_block_forward.1} parent=5 // pred_fallthru
      _
    %p2542 = scmp.le.s32.totalorder 2, %s8
    // Predicated region
    $region41: #{conv_block_forward.1} parent=5 // pred_check
      %p2543 = pneg %p2542
    $region42: #{conv_block_forward.1} parent=5 // pred_check_branch
      %2545 = sbr.rel (%p2543) target = $region44
    $region43: #{conv_block_forward.1} parent=5 // pred_region
      %s2546 = ssub.s32 %s8, 2
      // Predicated region
      $region45: #{conv_block_forward.1} parent=43 // pred_check
        %p2547 = pneg %p107
      $region46: #{conv_block_forward.1} parent=43 // pred_check_branch
        %2549 = sbr.rel (%p2547) target = $region48
      $region47: #{conv_block_forward.1} parent=43 // pred_region
        %p2550 = scmp.lt.s32.totalorder %s21, 1
        %s2551 = scalar_select %p2550, %s21, 1
        %p2552 = scmp.lt.s32.totalorder %s23, 0
        %s2553 = scalar_select %p2552, %s23, 0
        %s2554 = smul.addr %s2553, 32
        %s2555 = smul.addr %s2551, 32
        %s2556 = sadd.s32 %s2554, %s2555
        %s2557 = smul.addr %s2556, 8
        %s2558 = scalar_lea.vmem %s2, %s2557
      $region48: #{conv_block_forward.1} parent=43 // pred_fallthru
        _
    $region44: #{conv_block_forward.1} parent=5 // pred_fallthru
      _
  $region6: #{conv_block_forward.1} parent=0 // loop_footer
    %s12 = sadd.s32 1, %s8
  $region7: #{conv_block_forward.1} parent=0 // loop_footer_branch
    %7 = sbr.rel target = $region3
  $region8: #{conv_block_forward.1} parent=0 // loop_exit
    _

</llo_original>
